<compile_context>
chip_gen: v6e
topology: v6e:2x2x1
jax: 0.10.0
libtpu: 0.0.40
codegen_flags: <defaults>
</compile_context>

<pallas_src>
import functools

import jax
import jax.numpy as jnp
from jax.experimental import pallas as pl
from jax.experimental.pallas import tpu as pltpu

_LANE = 128
_SUBLANE = 8


def _round_up(n, m):
    return ((n + m - 1) // m) * m


# ----------------------------------------------------------------------------
# Fused forward kernel.  Grid = (batch, K_tiles):
#   batch axis  -> "parallel"  (independent videos; megacore-shardable)
#   K axis      -> "arbitrary" (reduction over the flattened frame features)
# Per (b, k): accumulate one (T, tk) @ (tk, D) backbone slab into an f32 VMEM
# scratch; on the last K step run the temporal attention (class token only)
# and the MLP head entirely in VMEM, then store one lane/sublane-dense block.
# ----------------------------------------------------------------------------
def _fused_forward_kernel(x_ref, wbb_ref, bbb_ref, wq_ref, wkv_ref, wo_ref,
                          w1_ref, b1_ref, w2_ref, b2_ref, o_ref, feats_acc,
                          *, d_model):
    k = pl.program_id(1)
    nk = pl.num_programs(1)

    @pl.when(k == 0)
    def _init():
        feats_acc[...] = jnp.zeros_like(feats_acc)

    # Frozen backbone stand-in, K-tiled.  The f32 -> bf16 cast happens here,
    # per tile, on the VPU (hidden under the input DMA) instead of a separate
    # whole-array XLA pass in the wrapper.
    x_blk = x_ref[...].astype(jnp.bfloat16)                              # (T, tk)
    feats_acc[...] += jnp.dot(x_blk, wbb_ref[...],
                              preferred_element_type=jnp.float32)        # (T, D)

    @pl.when(k == nk - 1)
    def _finalize():
        feats = feats_acc[...] + bbb_ref[...]                            # (T, D) f32
        feats_b = feats.astype(jnp.bfloat16)

        # K/V projection over all T rows: one fused (D, 2D) weight push.
        kv = jnp.dot(feats_b, wkv_ref[...],
                     preferred_element_type=jnp.float32)                 # (T, 2D) f32
        kmat = kv[:, :d_model]                                           # (T, D)
        vmat = kv[:, d_model:]                                           # (T, D)

        # Q projection only for the class-token row (scale folded into wq).
        q = jnp.dot(feats_b[0:1, :], wq_ref[...],
                    preferred_element_type=jnp.float32)                  # (1, D) f32

        # Class-token attention off the MXU (VPU multiply + XLU reductions).
        s = jnp.sum(q * kmat, axis=-1, keepdims=True)                    # (T, 1)
        s = s - jnp.max(s, axis=0, keepdims=True)
        p = jnp.exp(s)
        p = p * pl.reciprocal(jnp.sum(p, axis=0, keepdims=True), approx=True)
        ctx = jnp.sum(p * vmat, axis=0, keepdims=True)                   # (1, D)

        # Residual + output projection on the class token only.
        tok = feats[0:1, :] + jnp.dot(ctx.astype(jnp.bfloat16), wo_ref[...],
                                      preferred_element_type=jnp.float32)  # (1, D)

        # MLP head on a sublane-dense (8, D) slab (8 identical rows) so the
        # bias add / ReLU / final store are full-vreg, unmasked ops.
        tok8 = jnp.broadcast_to(tok, (_SUBLANE, d_model)).astype(jnp.bfloat16)
        h = jnp.dot(tok8, w1_ref[...],
                    preferred_element_type=jnp.float32) + b1_ref[...]    # (8, h_pad)
        h = jnp.maximum(h, 0.0)
        out8 = jnp.dot(h.astype(jnp.bfloat16), w2_ref[...],
                       preferred_element_type=jnp.float32) + b2_ref[...]  # (8, c_pad)
        o_ref[0] = out8


# ----------------------------------------------------------------------------
# Wrapper: mirrors DownstreamTask.forward
# ----------------------------------------------------------------------------
def downstream_forward(x, params):
    B, T, C, H, W = x.shape
    F = C * H * W
    d_model = params["wq"].shape[0]
    h_pad = params["w1"].shape[1]
    c_pad = params["w2"].shape[1]
    n_classes = params["n_classes"]

    # glue: (B, T, C, H, W) -> (B*T, F), like torch.reshape; NO dtype cast
    # here — the bf16 cast is done per-tile inside the kernel.
    x_flat = x.reshape(B * T, F)

    # K-tile for the backbone matmul: biggest 128-multiple dividing F.
    # TODO(synk): for real CLIP frame sizes (F ~ 1.5e5, D >= 512) also tile
    # the D/output axis and rebudget tiles for v7x's 64 MiB VMEM.
    tk = next((t for t in (512, 256, 128) if F % t == 0), F)
    nk = F // tk

    kernel = functools.partial(_fused_forward_kernel, d_model=d_model)

    # Advisory cost hint for the XLA scheduler around the custom call.
    flops = (2 * B * T * F * d_model                       # backbone
             + 2 * B * T * d_model * 2 * d_model           # K/V projection
             + 2 * B * d_model * d_model                   # Q (class token)
             + 4 * B * T * d_model                         # scores + ctx (VPU)
             + 2 * B * d_model * d_model                   # out projection
             + 2 * B * _SUBLANE * (d_model * h_pad + h_pad * c_pad))  # head
    w_bytes = sum(int(v.size) * v.dtype.itemsize
                  for n, v in params.items() if n != "n_classes")
    bytes_accessed = x_flat.size * 4 + w_bytes + B * _SUBLANE * c_pad * 4

    grid_spec = pltpu.PrefetchScalarGridSpec(
        num_scalar_prefetch=0,
        grid=(B, nk),
        in_specs=[
            # Tiled operands of the backbone matmul (auto double-buffered VMEM).
            pl.BlockSpec((T, tk), lambda b, k: (b, k)),                # x
            pl.BlockSpec((tk, d_model), lambda b, k: (k, 0)),          # w_bb
            # Small VMEM-resident weights (constant block index -> fetched once).
            pl.BlockSpec((1, d_model), lambda b, k: (0, 0)),           # b_bb
            pl.BlockSpec((d_model, d_model), lambda b, k: (0, 0)),     # wq
            pl.BlockSpec((d_model, 2 * d_model), lambda b, k: (0, 0)), # wkv
            pl.BlockSpec((d_model, d_model), lambda b, k: (0, 0)),     # wo
            pl.BlockSpec((d_model, h_pad), lambda b, k: (0, 0)),       # w1
            pl.BlockSpec((1, h_pad), lambda b, k: (0, 0)),             # b1
            pl.BlockSpec((h_pad, c_pad), lambda b, k: (0, 0)),         # w2
            pl.BlockSpec((1, c_pad), lambda b, k: (0, 0)),             # b2
        ],
        out_specs=pl.BlockSpec((1, _SUBLANE, c_pad), lambda b, k: (b, 0, 0)),
        scratch_shapes=[pltpu.VMEM((T, d_model), jnp.float32)],        # feats acc
    )

    out_pad = pl.pallas_call(
        kernel,
        out_shape=jax.ShapeDtypeStruct((B, _SUBLANE, c_pad), jnp.float32),
        grid_spec=grid_spec,
        compiler_params=pltpu.CompilerParams(
            dimension_semantics=("parallel", "arbitrary"),
            vmem_limit_bytes=32 * 1024 * 1024),
        cost_estimate=pl.CostEstimate(flops=flops,
                                      transcendentals=B * T + B,
                                      bytes_accessed=bytes_accessed),
    )(x_flat, params["w_bb"], params["b_bb"], params["wq"], params["wkv"],
      params["wo"], params["w1"], params["b1"], params["w2"], params["b2"])

    # Row 0 of the 8-row slab and the first n_classes of the 128 padded lanes.
    return out_pad[:, 0, :n_classes]                                    # (B, n_classes)


# ----------------------------------------------------------------------------
# Parameter construction (one-time transforms: scale folding, K/V fusion,
# lane padding of the classifier head, bf16 weight storage).
# ----------------------------------------------------------------------------
def make_params(key, feat_in, d_model, n_classes):
    ks = jax.random.split(key, 7)
    s_in = 1.0 / float(feat_in) ** 0.5
    s_d = 1.0 / float(d_model) ** 0.5
    hidden = d_model // 2
    s_h = 1.0 / float(hidden) ** 0.5
    h_pad = _round_up(hidden, _LANE)
    c_pad = _round_up(n_classes, _LANE)

    wq = jax.random.normal(ks[1], (d_model, d_model), jnp.float32) * s_d
    wk = jax.random.normal(ks[2], (d_model, d_model), jnp.float32) * s_d
    wv = jax.random.normal(ks[3], (d_model, d_model), jnp.float32) * s_d

    w1 = jax.random.normal(ks[5], (d_model, hidden), jnp.float32) * s_d
    w2 = jax.random.normal(ks[6], (hidden, n_classes), jnp.float32) * s_h
    # Zero-pad the head to full 128-lane width (padding lanes stay exactly 0).
    w1p = jnp.zeros((d_model, h_pad), jnp.float32).at[:, :hidden].set(w1)
    w2p = jnp.zeros((h_pad, c_pad), jnp.float32).at[:hidden, :n_classes].set(w2)

    return {
        "w_bb": (jax.random.normal(ks[0], (feat_in, d_model), jnp.float32)
                 * s_in).astype(jnp.bfloat16),
        "b_bb": jnp.zeros((1, d_model), jnp.float32),
        # 1/sqrt(d_model) attention scale folded into wq (single head).
        "wq": (wq * (1.0 / float(d_model) ** 0.5)).astype(jnp.bfloat16),
        # K and V fused into one (D, 2D) projection (Q kept separate — it is
        # only applied to the class-token row).
        "wkv": jnp.concatenate([wk, wv], axis=1).astype(jnp.bfloat16),
        "wo": (jax.random.normal(ks[4], (d_model, d_model), jnp.float32)
               * s_d).astype(jnp.bfloat16),
        "w1": w1p.astype(jnp.bfloat16),
        "b1": jnp.zeros((1, h_pad), jnp.float32),
        "w2": w2p.astype(jnp.bfloat16),
        "b2": jnp.zeros((1, c_pad), jnp.float32),
        "n_classes": n_classes,
    }


if __name__ == "__main__":
    # small shapes consistent with the forward: video (B, T, C, H, W)
    B, T, C, H, W = 2, 8, 3, 16, 16
    D_MODEL, N_CLASSES = 128, 7

    key = jax.random.PRNGKey(0)
    k_x, k_p = jax.random.split(key)
    x = jax.random.normal(k_x, (B, T, C, H, W), jnp.float32)
    params = make_params(k_p, C * H * W, D_MODEL, N_CLASSES)

    out = downstream_forward(x, params)
    out = jax.block_until_ready(out)
    assert out.shape == (B, N_CLASSES), out.shape
    assert bool(jnp.all(jnp.isfinite(out)))
    print("KERNEL_OK")
</pallas_src>

<mosaic_0001>
module attributes {stable_mosaic.version = 11 : i64} {
  func.func @_fused_forward_kernel(%arg0: i32, %arg1: i32, %arg2: memref<8x256xf32, #tpu.memory_space<vmem>>, %arg3: memref<256x128xbf16, #tpu.memory_space<vmem>>, %arg4: memref<1x128xf32, #tpu.memory_space<vmem>>, %arg5: memref<128x128xbf16, #tpu.memory_space<vmem>>, %arg6: memref<128x256xbf16, #tpu.memory_space<vmem>>, %arg7: memref<128x128xbf16, #tpu.memory_space<vmem>>, %arg8: memref<128x128xbf16, #tpu.memory_space<vmem>>, %arg9: memref<1x128xf32, #tpu.memory_space<vmem>>, %arg10: memref<128x128xbf16, #tpu.memory_space<vmem>>, %arg11: memref<1x128xf32, #tpu.memory_space<vmem>>, %arg12: memref<1x8x128xf32, #tpu.memory_space<vmem>>, %arg13: memref<8x128xf32, #tpu.memory_space<vmem>>) attributes {dimension_semantics = [#tpu.dimension_semantics<parallel>, #tpu.dimension_semantics<arbitrary>], iteration_bounds = array<i64: 2, 3>, scalar_prefetch = 0 : i64, scratch_operands = 1 : i64, tpu.core_type = #tpu.core_type<tc>, window_params = [{transform_indices = @transform_0, window_bounds = array<i64: 8, 256>}, {transform_indices = @transform_1, window_bounds = array<i64: 256, 128>}, {pipeline_mode = #tpu.pipeline_mode<synchronous>, transform_indices = @transform_2, window_bounds = array<i64: 1, 128>}, {pipeline_mode = #tpu.pipeline_mode<synchronous>, transform_indices = @transform_3, window_bounds = array<i64: 128, 128>}, {pipeline_mode = #tpu.pipeline_mode<synchronous>, transform_indices = @transform_4, window_bounds = array<i64: 128, 256>}, {pipeline_mode = #tpu.pipeline_mode<synchronous>, transform_indices = @transform_5, window_bounds = array<i64: 128, 128>}, {pipeline_mode = #tpu.pipeline_mode<synchronous>, transform_indices = @transform_6, window_bounds = array<i64: 128, 128>}, {pipeline_mode = #tpu.pipeline_mode<synchronous>, transform_indices = @transform_7, window_bounds = array<i64: 1, 128>}, {pipeline_mode = #tpu.pipeline_mode<synchronous>, transform_indices = @transform_8, window_bounds = array<i64: 128, 128>}, {pipeline_mode = #tpu.pipeline_mode<synchronous>, transform_indices = @transform_9, window_bounds = array<i64: 1, 128>}, {transform_indices = @transform_10, window_bounds = array<i64: 1, 8, 128>}]} {
    %c0_i32 = arith.constant 0 : i32
    %0 = arith.cmpi eq, %arg1, %c0_i32 : i32
    %1 = arith.extui %0 : i1 to i32
    %c0_i32_0 = arith.constant 0 : i32
    %2 = arith.cmpi ne, %1, %c0_i32_0 : i32
    scf.if %2 {
      %cst_9 = arith.constant 0.000000e+00 : f32
      %13 = vector.broadcast %cst_9 : f32 to vector<8x128xf32>
      %c0_10 = arith.constant 0 : index
      %c0_11 = arith.constant 0 : index
      %14 = vector.load %arg13[%c0_10, %c0_11] : memref<8x128xf32, #tpu.memory_space<vmem>>, vector<8x128xf32>
      tpu.vector_store %arg13[%c0_10, %c0_11], %13 {strides = array<i32>} : memref<8x128xf32, #tpu.memory_space<vmem>>, vector<8x128xf32>,
    } else {
    }
    %c0 = arith.constant 0 : index
    %c0_1 = arith.constant 0 : index
    %3 = vector.load %arg2[%c0, %c0_1] : memref<8x256xf32, #tpu.memory_space<vmem>>, vector<8x256xf32>
    %4 = arith.truncf %3 : vector<8x256xf32> to vector<8x256xbf16>
    %c0_2 = arith.constant 0 : index
    %c0_3 = arith.constant 0 : index
    %5 = vector.load %arg13[%c0_2, %c0_3] : memref<8x128xf32, #tpu.memory_space<vmem>>, vector<8x128xf32>
    %c0_4 = arith.constant 0 : index
    %c0_5 = arith.constant 0 : index
    %6 = vector.load %arg3[%c0_4, %c0_5] : memref<256x128xbf16, #tpu.memory_space<vmem>>, vector<256x128xbf16>
    %cst = arith.constant dense<0.000000e+00> : vector<8x128xf32>
    %7 = tpu.matmul %4, %6, %cst {dimension_numbers = #tpu.dot_dimension_numbers<[1], [0], [0], [1], [0, 0, 1, 1], [], []>} : vector<8x256xbf16>, vector<256x128xbf16>, vector<8x128xf32> -> vector<8x128xf32>
    %8 = arith.addf %5, %7 : vector<8x128xf32>
    %c0_6 = arith.constant 0 : index
    %c0_7 = arith.constant 0 : index
    %9 = vector.load %arg13[%c0_6, %c0_7] : memref<8x128xf32, #tpu.memory_space<vmem>>, vector<8x128xf32>
    tpu.vector_store %arg13[%c0_6, %c0_7], %8 {strides = array<i32>} : memref<8x128xf32, #tpu.memory_space<vmem>>, vector<8x128xf32>,
    %c2_i32 = arith.constant 2 : i32
    %10 = arith.cmpi eq, %arg1, %c2_i32 : i32
    %11 = arith.extui %10 : i1 to i32
    %c0_i32_8 = arith.constant 0 : i32
    %12 = arith.cmpi ne, %11, %c0_i32_8 : i32
    scf.if %12 {
      %c0_9 = arith.constant 0 : index
      %c0_10 = arith.constant 0 : index
      %13 = vector.load %arg13[%c0_9, %c0_10] : memref<8x128xf32, #tpu.memory_space<vmem>>, vector<8x128xf32>
      %c0_11 = arith.constant 0 : index
      %c0_12 = arith.constant 0 : index
      %14 = vector.load %arg4[%c0_11, %c0_12] : memref<1x128xf32, #tpu.memory_space<vmem>>, vector<1x128xf32>
      %15 = vector.broadcast %14 : vector<1x128xf32> to vector<8x128xf32>
      %16 = arith.addf %13, %15 : vector<8x128xf32>
      %17 = arith.truncf %16 : vector<8x128xf32> to vector<8x128xbf16>
      %c0_13 = arith.constant 0 : index
      %c0_14 = arith.constant 0 : index
      %18 = vector.load %arg6[%c0_13, %c0_14] : memref<128x256xbf16, #tpu.memory_space<vmem>>, vector<128x256xbf16>
      %cst_15 = arith.constant dense<0.000000e+00> : vector<8x256xf32>
      %19 = tpu.matmul %17, %18, %cst_15 {dimension_numbers = #tpu.dot_dimension_numbers<[1], [0], [0], [1], [0, 0, 1, 1], [], []>} : vector<8x128xbf16>, vector<128x256xbf16>, vector<8x256xf32> -> vector<8x256xf32>
      %20 = vector.extract_strided_slice %19 {offsets = [0, 0], sizes = [8, 128], strides = [1, 1]} : vector<8x256xf32> to vector<8x128xf32>
      %21 = vector.extract_strided_slice %19 {offsets = [0, 128], sizes = [8, 128], strides = [1, 1]} : vector<8x256xf32> to vector<8x128xf32>
      %22 = vector.extract_strided_slice %17 {offsets = [0, 0], sizes = [1, 128], strides = [1, 1]} : vector<8x128xbf16> to vector<1x128xbf16>
      %c0_16 = arith.constant 0 : index
      %c0_17 = arith.constant 0 : index
      %23 = vector.load %arg5[%c0_16, %c0_17] : memref<128x128xbf16, #tpu.memory_space<vmem>>, vector<128x128xbf16>
      %cst_18 = arith.constant dense<0.000000e+00> : vector<1x128xf32>
      %24 = tpu.matmul %22, %23, %cst_18 {dimension_numbers = #tpu.dot_dimension_numbers<[1], [0], [0], [1], [0, 0, 1, 1], [], []>} : vector<1x128xbf16>, vector<128x128xbf16>, vector<1x128xf32> -> vector<1x128xf32>
      %25 = vector.broadcast %24 : vector<1x128xf32> to vector<8x128xf32>
      %26 = arith.mulf %25, %20 : vector<8x128xf32>
      %cst_19 = arith.constant dense<0.000000e+00> : vector<8xf32>
      %27 = vector.multi_reduction <add>, %26, %cst_19 [1] : vector<8x128xf32> to vector<8xf32>
      %28 = vector.shape_cast %27 : vector<8xf32> to vector<8x1xf32>
      %cst_20 = arith.constant dense<0xFF800000> : vector<1xf32>
      %29 = vector.multi_reduction <maximumf>, %28, %cst_20 [0] : vector<8x1xf32> to vector<1xf32>
      %30 = vector.shape_cast %29 : vector<1xf32> to vector<1x1xf32>
      %31 = vector.broadcast %30 : vector<1x1xf32> to vector<8x1xf32>
      %32 = arith.subf %28, %31 : vector<8x1xf32>
      %33 = math.exp %32 : vector<8x1xf32>
      %cst_21 = arith.constant dense<0.000000e+00> : vector<1xf32>
      %34 = vector.multi_reduction <add>, %33, %cst_21 [0] : vector<8x1xf32> to vector<1xf32>
      %35 = vector.shape_cast %34 : vector<1xf32> to vector<1x1xf32>
      %36 = tpu.reciprocal %35 {approx = true} : vector<1x1xf32> -> vector<1x1xf32>
      %37 = vector.broadcast %36 : vector<1x1xf32> to vector<8x1xf32>
      %38 = arith.mulf %33, %37 : vector<8x1xf32>
      %39 = vector.broadcast %38 : vector<8x1xf32> to vector<8x128xf32>
      %40 = arith.mulf %39, %21 : vector<8x128xf32>
      %cst_22 = arith.constant dense<0.000000e+00> : vector<128xf32>
      %41 = vector.multi_reduction <add>, %40, %cst_22 [0] : vector<8x128xf32> to vector<128xf32>
      %42 = vector.shape_cast %41 : vector<128xf32> to vector<1x128xf32>
      %43 = vector.extract_strided_slice %16 {offsets = [0, 0], sizes = [1, 128], strides = [1, 1]} : vector<8x128xf32> to vector<1x128xf32>
      %44 = arith.truncf %42 : vector<1x128xf32> to vector<1x128xbf16>
      %c0_23 = arith.constant 0 : index
      %c0_24 = arith.constant 0 : index
      %45 = vector.load %arg7[%c0_23, %c0_24] : memref<128x128xbf16, #tpu.memory_space<vmem>>, vector<128x128xbf16>
      %cst_25 = arith.constant dense<0.000000e+00> : vector<1x128xf32>
      %46 = tpu.matmul %44, %45, %cst_25 {dimension_numbers = #tpu.dot_dimension_numbers<[1], [0], [0], [1], [0, 0, 1, 1], [], []>} : vector<1x128xbf16>, vector<128x128xbf16>, vector<1x128xf32> -> vector<1x128xf32>
      %47 = arith.addf %43, %46 : vector<1x128xf32>
      %48 = vector.shape_cast %47 : vector<1x128xf32> to vector<1x128xf32>
      %49 = vector.broadcast %48 : vector<1x128xf32> to vector<8x128xf32>
      %50 = arith.truncf %49 : vector<8x128xf32> to vector<8x128xbf16>
      %c0_26 = arith.constant 0 : index
      %c0_27 = arith.constant 0 : index
      %51 = vector.load %arg8[%c0_26, %c0_27] : memref<128x128xbf16, #tpu.memory_space<vmem>>, vector<128x128xbf16>
      %cst_28 = arith.constant dense<0.000000e+00> : vector<8x128xf32>
      %52 = tpu.matmul %50, %51, %cst_28 {dimension_numbers = #tpu.dot_dimension_numbers<[1], [0], [0], [1], [0, 0, 1, 1], [], []>} : vector<8x128xbf16>, vector<128x128xbf16>, vector<8x128xf32> -> vector<8x128xf32>
      %c0_29 = arith.constant 0 : index
      %c0_30 = arith.constant 0 : index
      %53 = vector.load %arg9[%c0_29, %c0_30] : memref<1x128xf32, #tpu.memory_space<vmem>>, vector<1x128xf32>
      %54 = vector.broadcast %53 : vector<1x128xf32> to vector<8x128xf32>
      %55 = arith.addf %52, %54 : vector<8x128xf32>
      %cst_31 = arith.constant 0.000000e+00 : f32
      %56 = vector.broadcast %cst_31 : f32 to vector<8x128xf32>
      %57 = arith.maximumf %55, %56 : vector<8x128xf32>
      %58 = arith.truncf %57 : vector<8x128xf32> to vector<8x128xbf16>
      %c0_32 = arith.constant 0 : index
      %c0_33 = arith.constant 0 : index
      %59 = vector.load %arg10[%c0_32, %c0_33] : memref<128x128xbf16, #tpu.memory_space<vmem>>, vector<128x128xbf16>
      %cst_34 = arith.constant dense<0.000000e+00> : vector<8x128xf32>
      %60 = tpu.matmul %58, %59, %cst_34 {dimension_numbers = #tpu.dot_dimension_numbers<[1], [0], [0], [1], [0, 0, 1, 1], [], []>} : vector<8x128xbf16>, vector<128x128xbf16>, vector<8x128xf32> -> vector<8x128xf32>
      %c0_35 = arith.constant 0 : index
      %c0_36 = arith.constant 0 : index
      %61 = vector.load %arg11[%c0_35, %c0_36] : memref<1x128xf32, #tpu.memory_space<vmem>>, vector<1x128xf32>
      %62 = vector.broadcast %61 : vector<1x128xf32> to vector<8x128xf32>
      %63 = arith.addf %60, %62 : vector<8x128xf32>
      %c0_37 = arith.constant 0 : index
      %c0_38 = arith.constant 0 : index
      %c0_39 = arith.constant 0 : index
      %64 = vector.load %arg12[%c0_37, %c0_38, %c0_39] : memref<1x8x128xf32, #tpu.memory_space<vmem>>, vector<1x8x128xf32>
      %65 = vector.shape_cast %64 : vector<1x8x128xf32> to vector<8x128xf32>
      %66 = vector.shape_cast %63 : vector<8x128xf32> to vector<1x8x128xf32>
      tpu.vector_store %arg12[%c0_37, %c0_38, %c0_39], %66 {strides = array<i32>} : memref<1x8x128xf32, #tpu.memory_space<vmem>>, vector<1x8x128xf32>,
    } else {
    }
    return
  }
  func.func @transform_0(%arg0: i32, %arg1: i32) -> (i32, i32) {
    %c0_i32 = arith.constant 0 : i32
    return %arg0, %arg1 : i32, i32
  }
  func.func @transform_1(%arg0: i32, %arg1: i32) -> (i32, i32) {
    %c0_i32 = arith.constant 0 : i32
    %c0_i32_0 = arith.constant 0 : i32
    return %arg1, %c0_i32 : i32, i32
  }
  func.func @transform_2(%arg0: i32, %arg1: i32) -> (i32, i32) {
    %c0_i32 = arith.constant 0 : i32
    %c0_i32_0 = arith.constant 0 : i32
    %c0_i32_1 = arith.constant 0 : i32
    return %c0_i32, %c0_i32_0 : i32, i32
  }
  func.func @transform_3(%arg0: i32, %arg1: i32) -> (i32, i32) {
    %c0_i32 = arith.constant 0 : i32
    %c0_i32_0 = arith.constant 0 : i32
    %c0_i32_1 = arith.constant 0 : i32
    return %c0_i32, %c0_i32_0 : i32, i32
  }
  func.func @transform_4(%arg0: i32, %arg1: i32) -> (i32, i32) {
    %c0_i32 = arith.constant 0 : i32
    %c0_i32_0 = arith.constant 0 : i32
    %c0_i32_1 = arith.constant 0 : i32
    return %c0_i32, %c0_i32_0 : i32, i32
  }
  func.func @transform_5(%arg0: i32, %arg1: i32) -> (i32, i32) {
    %c0_i32 = arith.constant 0 : i32
    %c0_i32_0 = arith.constant 0 : i32
    %c0_i32_1 = arith.constant 0 : i32
    return %c0_i32, %c0_i32_0 : i32, i32
  }
  func.func @transform_6(%arg0: i32, %arg1: i32) -> (i32, i32) {
    %c0_i32 = arith.constant 0 : i32
    %c0_i32_0 = arith.constant 0 : i32
    %c0_i32_1 = arith.constant 0 : i32
    return %c0_i32, %c0_i32_0 : i32, i32
  }
  func.func @transform_7(%arg0: i32, %arg1: i32) -> (i32, i32) {
    %c0_i32 = arith.constant 0 : i32
    %c0_i32_0 = arith.constant 0 : i32
    %c0_i32_1 = arith.constant 0 : i32
    return %c0_i32, %c0_i32_0 : i32, i32
  }
  func.func @transform_8(%arg0: i32, %arg1: i32) -> (i32, i32) {
    %c0_i32 = arith.constant 0 : i32
    %c0_i32_0 = arith.constant 0 : i32
    %c0_i32_1 = arith.constant 0 : i32
    return %c0_i32, %c0_i32_0 : i32, i32
  }
  func.func @transform_9(%arg0: i32, %arg1: i32) -> (i32, i32) {
    %c0_i32 = arith.constant 0 : i32
    %c0_i32_0 = arith.constant 0 : i32
    %c0_i32_1 = arith.constant 0 : i32
    return %c0_i32, %c0_i32_0 : i32, i32
  }
  func.func @transform_10(%arg0: i32, %arg1: i32) -> (i32, i32, i32) {
    %c0_i32 = arith.constant 0 : i32
    %c0_i32_0 = arith.constant 0 : i32
    %c0_i32_1 = arith.constant 0 : i32
    return %arg0, %c0_i32, %c0_i32_0 : i32, i32, i32
  }
}

</mosaic_0001>

<llo_original>
// kernel: tpu_custom_call.1
$region0: #{tpu_custom_call.1}
  #allocation0 [shape = 'u32[]', space=smem, size = 0x4, offset = 0x4, fixed_abs, tag = 'smem constant byte address 0x4 - core index']
  #allocation1 [shape = 'u32[144,128]{1,0:T(1,128)}', space=vmem, size = 0x12000, scoped, tag = 'internal scratch']
  #allocation2 [shape = 'f32[8,128]{1,0:T(8,128)}', space=vmem, size = 0x1000, scoped, tag = 'scratch operand']
  %s0 = inlined_call_operand.hbm [shape: f32[16,768], index: 0, kind: input, shape index: {}]
  %s1 = inlined_call_operand.hbm [shape: bf16[768,128], index: 1, kind: input, shape index: {}]
  %s2 = inlined_call_operand.vmem [shape: f32[1,128], index: 2, kind: input, shape index: {}]
  %s3 = inlined_call_operand.hbm [shape: bf16[128,128], index: 3, kind: input, shape index: {}]
  %s4 = inlined_call_operand.hbm [shape: bf16[128,256], index: 4, kind: input, shape index: {}]
  %s5 = inlined_call_operand.hbm [shape: bf16[128,128], index: 5, kind: input, shape index: {}]
  %s6 = inlined_call_operand.hbm [shape: bf16[128,128], index: 6, kind: input, shape index: {}]
  %s7 = inlined_call_operand.vmem [shape: f32[1,128], index: 7, kind: input, shape index: {}]
  %s8 = inlined_call_operand.hbm [shape: bf16[128,128], index: 8, kind: input, shape index: {}]
  %s9 = inlined_call_operand.vmem [shape: f32[1,128], index: 9, kind: input, shape index: {}]
  %s10 = inlined_call_operand.hbm [shape: f32[2,8,128], index: 10, kind: output, shape index: {}]
  %s11 = sld [smem:[#allocation0]]
  $region109: #{tpu_custom_call.1} parent=0
    _
  %s13 = ssub.s32 1, %s11
  %s14 = scalar_select 0, %s13, %s11
  $region1: #{tpu_custom_call.1} parent=0
    #allocation3 [shape = 'u8[16384]{0}', space=vmem, size = 0x4000, scoped, tag = 'input window, operand 0']
    #allocation4 [shape = 's32[2]{0}', space=sflag, size = 0x8, scoped, tag = 'scoped memory for tpu_custom_call.1']
    #allocation5 [shape = 's32[2]{0}', space=sflag, size = 0x8, scoped, tag = 'scoped memory for tpu_custom_call.1']
    #allocation6 [shape = 'u8[131072]{0}', space=vmem, size = 0x20000, scoped, tag = 'input window, operand 1']
    #allocation7 [shape = 's32[2]{0}', space=sflag, size = 0x8, scoped, tag = 'scoped memory for tpu_custom_call.1']
    #allocation8 [shape = 'u8[32768]{0}', space=vmem, size = 0x8000, scoped, tag = 'input window, operand 3, single buffered']
    #allocation9 [shape = 'u8[65536]{0}', space=vmem, size = 0x10000, scoped, tag = 'input window, operand 4, single buffered']
    #allocation10 [shape = 's32[1]{0}', space=sflag, size = 0x4, scoped, tag = 'scoped memory for tpu_custom_call.1']
    #allocation11 [shape = 'u8[32768]{0}', space=vmem, size = 0x8000, scoped, tag = 'input window, operand 5, single buffered']
    #allocation12 [shape = 'u8[32768]{0}', space=vmem, size = 0x8000, scoped, tag = 'input window, operand 6, single buffered']
    #allocation13 [shape = 's32[1]{0}', space=sflag, size = 0x4, scoped, tag = 'scoped memory for tpu_custom_call.1']
    #allocation14 [shape = 'u8[32768]{0}', space=vmem, size = 0x8000, scoped, tag = 'input window, operand 8, single buffered']
    #allocation15 [shape = 'u8[8192]{0}', space=vmem, size = 0x2000, scoped, tag = 'output window, operand 0']
    %15 = vsyncpa [#allocation4], 0
    %s16 = scalar_lea.sflag [#allocation4], 1
    %17 = vsyncpa %s16, 0
    %18 = vsyncpa [#allocation7], 0
    %s19 = scalar_lea.sflag [#allocation7], 1
    %20 = vsyncpa %s19, 0
    %21 = vsyncpa [#allocation10], 0
    %22 = vsyncpa [#allocation13], 0
    %23 = vsyncpa [#allocation5], 0
    %s24 = scalar_lea.sflag [#allocation5], 1
    %25 = vsyncpa %s24, 0
    loop: start=0, step=1, limit=8
    $region2: #{tpu_custom_call.1} parent=1 // loop_pre_header
      _
    $region3: #{tpu_custom_call.1} parent=1 // loop_header
      %s27 = sphi 0, %s31
      %p28 = scmp.ge.s32.totalorder %s27, 8
      %s34 = sphi 0, %s46
      %s35 = sphi 0, %s42
      %s36 = sphi 0, %s34
      %s37 = sphi 0, %s35
      %s38 = sphi 0, %s36
      %s39 = sphi 0, %s37
      %s51 = sphi 0, %s53
      %s54 = sphi 0, %s51
      %s55 = sphi 0, %s54
      %s71 = sphi 0, %s55
      %s77 = sphi 0, %s79
      %s80 = sphi 0, %s77
      %s81 = sphi 0, %s80
      %s97 = sphi 0, %s81
      %s101 = sphi 0, %s101
      %s103 = sphi 0, %s101
      %s104 = sphi 0, %s103
      %s118 = sphi 0, %s104
      %s122 = sphi 0, %s122
      %s124 = sphi 0, %s122
      %s125 = sphi 0, %s124
      %s139 = sphi 0, %s125
      %s143 = sphi 0, %s143
      %s145 = sphi 0, %s143
      %s146 = sphi 0, %s145
      %s160 = sphi 0, %s146
      %s164 = sphi 0, %s164
      %s166 = sphi 0, %s164
      %s167 = sphi 0, %s166
      %s181 = sphi 0, %s167
      %s185 = sphi 0, %s185
      %s187 = sphi 0, %s185
      %s188 = sphi 0, %s187
      %s202 = sphi 0, %s188
      %s206 = sphi 0, %s206
      %s208 = sphi 0, %s206
      %s209 = sphi 0, %s208
      %s223 = sphi 0, %s209
      %s227 = sphi 0, %s227
      %s229 = sphi 0, %s227
      %s230 = sphi 0, %s229
      %s244 = sphi 0, %s230
      %s248 = sphi 0, %s248
      %s250 = sphi 0, %s248
      %s251 = sphi 0, %s250
      %s265 = sphi 0, %s251
      %s271 = sphi 0, %s273
      %s274 = sphi 0, %s271
      %s275 = sphi 0, %s274
      %s291 = sphi 0, %s275
    $region4: #{tpu_custom_call.1} parent=1 // loop_header_branch
      %30 = sbr.rel (%p28) target = $region8
    $region5: #{tpu_custom_call.1} parent=1 // loop_body
      %s32 = ssub.s32 %s27, 1
      %s33 = ssub.s32 %s27, 2
      %s40 = sadd.s32 1, %s35
      %p41 = scmp.ge.s32.totalorder %s40, 3
      %s42 = scalar_select %p41, 0, %s40
      %s43 = sadd.s32 1, %s34
      %s44 = scalar_select %p41, %s43, %s34
      %p45 = scmp.ge.s32.totalorder %s44, 2
      %s46 = scalar_select %p45, 0, %s44
      %s47 = ssub.s32 %s34, %s46
      %s48 = ssub.s32 %s35, %s42
      %s49 = sor.u32 %s47, %s48
      %p50 = scmp.eq.s32.totalorder %s49, 0
      %s52 = sadd.s32 %s51, 1
      %s53 = scalar_select %p50, %s51, %s52
      %p56 = pneg %p50
      %p57 = scmp.eq.s32.totalorder %s27, 5
      %p58 = por %p56, %p57
      %p59 = scmp.ne.s32.totalorder %s51, %s54
      %p60 = scmp.eq.s32.totalorder %s27, 0
      %p61 = por %p59, %p60
      %p62 = scmp.ne.s32.totalorder %s51, %s54
      %p63 = scmp.eq.s32.totalorder %s32, 5
      %p64 = por %p62, %p63
      %p65 = scmp.ne.s32.totalorder %s54, %s55
      %p66 = scmp.eq.s32.totalorder %s32, 0
      %p67 = por %p65, %p66
      %p68 = scmp.ne.s32.totalorder %s54, %s55
      %p69 = scmp.eq.s32.totalorder %s33, 5
      %p70 = por %p68, %p69
      %p72 = scmp.ne.s32.totalorder %s55, %s71
      %p73 = scmp.eq.s32.totalorder %s33, 0
      %p74 = por %p72, %p73
      %s75 = ssub.s32 %s35, %s42
      %p76 = scmp.eq.s32.totalorder %s75, 0
      %s78 = sadd.s32 %s77, 1
      %s79 = scalar_select %p76, %s77, %s78
      %p82 = pneg %p76
      %p83 = scmp.eq.s32.totalorder %s27, 5
      %p84 = por %p82, %p83
      %p85 = scmp.ne.s32.totalorder %s77, %s80
      %p86 = scmp.eq.s32.totalorder %s27, 0
      %p87 = por %p85, %p86
      %p88 = scmp.ne.s32.totalorder %s77, %s80
      %p89 = scmp.eq.s32.totalorder %s32, 5
      %p90 = por %p88, %p89
      %p91 = scmp.ne.s32.totalorder %s80, %s81
      %p92 = scmp.eq.s32.totalorder %s32, 0
      %p93 = por %p91, %p92
      %p94 = scmp.ne.s32.totalorder %s80, %s81
      %p95 = scmp.eq.s32.totalorder %s33, 5
      %p96 = por %p94, %p95
      %p98 = scmp.ne.s32.totalorder %s81, %s97
      %p99 = scmp.eq.s32.totalorder %s33, 0
      %p100 = por %p98, %p99
      %s102 = sadd.s32 %s101, 1
      %p105 = scmp.eq.s32.totalorder %s27, 5
      %p106 = scmp.ne.s32.totalorder %s101, %s103
      %p107 = scmp.eq.s32.totalorder %s27, 0
      %p108 = por %p106, %p107
      %p109 = scmp.ne.s32.totalorder %s101, %s103
      %p110 = scmp.eq.s32.totalorder %s32, 5
      %p111 = por %p109, %p110
      %p112 = scmp.ne.s32.totalorder %s103, %s104
      %p113 = scmp.eq.s32.totalorder %s32, 0
      %p114 = por %p112, %p113
      %p115 = scmp.ne.s32.totalorder %s103, %s104
      %p116 = scmp.eq.s32.totalorder %s33, 5
      %p117 = por %p115, %p116
      %p119 = scmp.ne.s32.totalorder %s104, %s118
      %p120 = scmp.eq.s32.totalorder %s33, 0
      %p121 = por %p119, %p120
      %s123 = sadd.s32 %s122, 1
      %p126 = scmp.eq.s32.totalorder %s27, 5
      %p127 = scmp.ne.s32.totalorder %s122, %s124
      %p128 = scmp.eq.s32.totalorder %s27, 0
      %p129 = por %p127, %p128
      %p130 = scmp.ne.s32.totalorder %s122, %s124
      %p131 = scmp.eq.s32.totalorder %s32, 5
      %p132 = por %p130, %p131
      %p133 = scmp.ne.s32.totalorder %s124, %s125
      %p134 = scmp.eq.s32.totalorder %s32, 0
      %p135 = por %p133, %p134
      %p136 = scmp.ne.s32.totalorder %s124, %s125
      %p137 = scmp.eq.s32.totalorder %s33, 5
      %p138 = por %p136, %p137
      %p140 = scmp.ne.s32.totalorder %s125, %s139
      %p141 = scmp.eq.s32.totalorder %s33, 0
      %p142 = por %p140, %p141
      %s144 = sadd.s32 %s143, 1
      %p147 = scmp.eq.s32.totalorder %s27, 5
      %p148 = scmp.ne.s32.totalorder %s143, %s145
      %p149 = scmp.eq.s32.totalorder %s27, 0
      %p150 = por %p148, %p149
      %p151 = scmp.ne.s32.totalorder %s143, %s145
      %p152 = scmp.eq.s32.totalorder %s32, 5
      %p153 = por %p151, %p152
      %p154 = scmp.ne.s32.totalorder %s145, %s146
      %p155 = scmp.eq.s32.totalorder %s32, 0
      %p156 = por %p154, %p155
      %p157 = scmp.ne.s32.totalorder %s145, %s146
      %p158 = scmp.eq.s32.totalorder %s33, 5
      %p159 = por %p157, %p158
      %p161 = scmp.ne.s32.totalorder %s146, %s160
      %p162 = scmp.eq.s32.totalorder %s33, 0
      %p163 = por %p161, %p162
      %s165 = sadd.s32 %s164, 1
      %p168 = scmp.eq.s32.totalorder %s27, 5
      %p169 = scmp.ne.s32.totalorder %s164, %s166
      %p170 = scmp.eq.s32.totalorder %s27, 0
      %p171 = por %p169, %p170
      %p172 = scmp.ne.s32.totalorder %s164, %s166
      %p173 = scmp.eq.s32.totalorder %s32, 5
      %p174 = por %p172, %p173
      %p175 = scmp.ne.s32.totalorder %s166, %s167
      %p176 = scmp.eq.s32.totalorder %s32, 0
      %p177 = por %p175, %p176
      %p178 = scmp.ne.s32.totalorder %s166, %s167
      %p179 = scmp.eq.s32.totalorder %s33, 5
      %p180 = por %p178, %p179
      %p182 = scmp.ne.s32.totalorder %s167, %s181
      %p183 = scmp.eq.s32.totalorder %s33, 0
      %p184 = por %p182, %p183
      %s186 = sadd.s32 %s185, 1
      %p189 = scmp.eq.s32.totalorder %s27, 5
      %p190 = scmp.ne.s32.totalorder %s185, %s187
      %p191 = scmp.eq.s32.totalorder %s27, 0
      %p192 = por %p190, %p191
      %p193 = scmp.ne.s32.totalorder %s185, %s187
      %p194 = scmp.eq.s32.totalorder %s32, 5
      %p195 = por %p193, %p194
      %p196 = scmp.ne.s32.totalorder %s187, %s188
      %p197 = scmp.eq.s32.totalorder %s32, 0
      %p198 = por %p196, %p197
      %p199 = scmp.ne.s32.totalorder %s187, %s188
      %p200 = scmp.eq.s32.totalorder %s33, 5
      %p201 = por %p199, %p200
      %p203 = scmp.ne.s32.totalorder %s188, %s202
      %p204 = scmp.eq.s32.totalorder %s33, 0
      %p205 = por %p203, %p204
      %s207 = sadd.s32 %s206, 1
      %p210 = scmp.eq.s32.totalorder %s27, 5
      %p211 = scmp.ne.s32.totalorder %s206, %s208
      %p212 = scmp.eq.s32.totalorder %s27, 0
      %p213 = por %p211, %p212
      %p214 = scmp.ne.s32.totalorder %s206, %s208
      %p215 = scmp.eq.s32.totalorder %s32, 5
      %p216 = por %p214, %p215
      %p217 = scmp.ne.s32.totalorder %s208, %s209
      %p218 = scmp.eq.s32.totalorder %s32, 0
      %p219 = por %p217, %p218
      %p220 = scmp.ne.s32.totalorder %s208, %s209
      %p221 = scmp.eq.s32.totalorder %s33, 5
      %p222 = por %p220, %p221
      %p224 = scmp.ne.s32.totalorder %s209, %s223
      %p225 = scmp.eq.s32.totalorder %s33, 0
      %p226 = por %p224, %p225
      %s228 = sadd.s32 %s227, 1
      %p231 = scmp.eq.s32.totalorder %s27, 5
      %p232 = scmp.ne.s32.totalorder %s227, %s229
      %p233 = scmp.eq.s32.totalorder %s27, 0
      %p234 = por %p232, %p233
      %p235 = scmp.ne.s32.totalorder %s227, %s229
      %p236 = scmp.eq.s32.totalorder %s32, 5
      %p237 = por %p235, %p236
      %p238 = scmp.ne.s32.totalorder %s229, %s230
      %p239 = scmp.eq.s32.totalorder %s32, 0
      %p240 = por %p238, %p239
      %p241 = scmp.ne.s32.totalorder %s229, %s230
      %p242 = scmp.eq.s32.totalorder %s33, 5
      %p243 = por %p241, %p242
      %p245 = scmp.ne.s32.totalorder %s230, %s244
      %p246 = scmp.eq.s32.totalorder %s33, 0
      %p247 = por %p245, %p246
      %s249 = sadd.s32 %s248, 1
      %p252 = scmp.eq.s32.totalorder %s27, 5
      %p253 = scmp.ne.s32.totalorder %s248, %s250
      %p254 = scmp.eq.s32.totalorder %s27, 0
      %p255 = por %p253, %p254
      %p256 = scmp.ne.s32.totalorder %s248, %s250
      %p257 = scmp.eq.s32.totalorder %s32, 5
      %p258 = por %p256, %p257
      %p259 = scmp.ne.s32.totalorder %s250, %s251
      %p260 = scmp.eq.s32.totalorder %s32, 0
      %p261 = por %p259, %p260
      %p262 = scmp.ne.s32.totalorder %s250, %s251
      %p263 = scmp.eq.s32.totalorder %s33, 5
      %p264 = por %p262, %p263
      %p266 = scmp.ne.s32.totalorder %s251, %s265
      %p267 = scmp.eq.s32.totalorder %s33, 0
      %p268 = por %p266, %p267
      %s269 = ssub.s32 %s34, %s46
      %p270 = scmp.eq.s32.totalorder %s269, 0
      %s272 = sadd.s32 %s271, 1
      %s273 = scalar_select %p270, %s271, %s272
      %p276 = pneg %p270
      %p277 = scmp.eq.s32.totalorder %s27, 5
      %p278 = por %p276, %p277
      %p279 = scmp.ne.s32.totalorder %s271, %s274
      %p280 = scmp.eq.s32.totalorder %s27, 0
      %p281 = por %p279, %p280
      %p282 = scmp.ne.s32.totalorder %s271, %s274
      %p283 = scmp.eq.s32.totalorder %s32, 5
      %p284 = por %p282, %p283
      %p285 = scmp.ne.s32.totalorder %s274, %s275
      %p286 = scmp.eq.s32.totalorder %s32, 0
      %p287 = por %p285, %p286
      %p288 = scmp.ne.s32.totalorder %s274, %s275
      %p289 = scmp.eq.s32.totalorder %s33, 5
      %p290 = por %p288, %p289
      %p292 = scmp.ne.s32.totalorder %s275, %s291
      %p293 = scmp.eq.s32.totalorder %s33, 0
      %p294 = por %p292, %p293
      %p295 = scmp.le.s32.totalorder 1, %s27
      %p296 = scmp.lt.s32.totalorder %s27, 7
      %p297 = pnand %p295, %p296
      %p298 = pneg %p297
      // Predicated region
      $region9: #{tpu_custom_call.1} parent=5 // pred_check
        _
      $region10: #{tpu_custom_call.1} parent=5 // pred_check_branch
        %300 = sbr.rel (%p297) target = $region12
      $region11: #{tpu_custom_call.1} parent=5 // pred_region
        %s301 = ssub.s32 %s27, 1
        // Predicated region
        $region13: #{tpu_custom_call.1} parent=11 // pred_check
          %p302 = pneg %p114
        $region14: #{tpu_custom_call.1} parent=11 // pred_check_branch
          %304 = sbr.rel (%p302) target = $region16
        $region15: #{tpu_custom_call.1} parent=11 // pred_region
          _
        $region16: #{tpu_custom_call.1} parent=11 // pred_fallthru
          _
        // Predicated region
        $region17: #{tpu_custom_call.1} parent=11 // pred_check
          %p305 = pneg %p135
        $region18: #{tpu_custom_call.1} parent=11 // pred_check_branch
          %307 = sbr.rel (%p305) target = $region20
        $region19: #{tpu_custom_call.1} parent=11 // pred_region
          %s309 = ssub.s32 1024, 1024
          %310 = vsyncadd [#allocation7], %s309
          %s311 = sshll.u32 [#allocation8], 4
          %s312 = int_to_ptr.vmem [resolvable:$true] %s311
          %317 = dma.hbm_to_vmem [thread:$0]  %s3, 1024, %s312, [#allocation7], 64, 64, 4
        $region20: #{tpu_custom_call.1} parent=11 // pred_fallthru
          _
        // Predicated region
        $region21: #{tpu_custom_call.1} parent=11 // pred_check
          %p318 = pneg %p156
        $region22: #{tpu_custom_call.1} parent=11 // pred_check_branch
          %320 = sbr.rel (%p318) target = $region24
        $region23: #{tpu_custom_call.1} parent=11 // pred_region
          %s322 = ssub.s32 2048, 2048
          %323 = vsyncadd [#allocation10], %s322
          %s324 = sshll.u32 [#allocation9], 4
          %s325 = int_to_ptr.vmem [resolvable:$true] %s324
          %330 = dma.hbm_to_vmem [thread:$0]  %s4, 2048, %s325, [#allocation10], 128, 128, 8
        $region24: #{tpu_custom_call.1} parent=11 // pred_fallthru
          _
        // Predicated region
        $region25: #{tpu_custom_call.1} parent=11 // pred_check
          %p331 = pneg %p177
        $region26: #{tpu_custom_call.1} parent=11 // pred_check_branch
          %333 = sbr.rel (%p331) target = $region28
        $region27: #{tpu_custom_call.1} parent=11 // pred_region
          %s335 = ssub.s32 1024, 1024
          %336 = vsyncadd [#allocation10], %s335
          %s337 = sshll.u32 [#allocation11], 4
          %s338 = int_to_ptr.vmem [resolvable:$true] %s337
          %343 = dma.hbm_to_vmem [thread:$0]  %s5, 1024, %s338, [#allocation10], 64, 64, 4
        $region28: #{tpu_custom_call.1} parent=11 // pred_fallthru
          _
        // Predicated region
        $region29: #{tpu_custom_call.1} parent=11 // pred_check
          %p344 = pneg %p198
        $region30: #{tpu_custom_call.1} parent=11 // pred_check_branch
          %346 = sbr.rel (%p344) target = $region32
        $region31: #{tpu_custom_call.1} parent=11 // pred_region
          %s348 = ssub.s32 1024, 1024
          %349 = vsyncadd [#allocation13], %s348
          %s350 = sshll.u32 [#allocation12], 4
          %s351 = int_to_ptr.vmem [resolvable:$true] %s350
          %356 = dma.hbm_to_vmem [thread:$0]  %s6, 1024, %s351, [#allocation13], 64, 64, 4
        $region32: #{tpu_custom_call.1} parent=11 // pred_fallthru
          _
        // Predicated region
        $region33: #{tpu_custom_call.1} parent=11 // pred_check
          %p357 = pneg %p219
        $region34: #{tpu_custom_call.1} parent=11 // pred_check_branch
          %359 = sbr.rel (%p357) target = $region36
        $region35: #{tpu_custom_call.1} parent=11 // pred_region
          _
        $region36: #{tpu_custom_call.1} parent=11 // pred_fallthru
          _
        // Predicated region
        $region37: #{tpu_custom_call.1} parent=11 // pred_check
          %p360 = pneg %p240
        $region38: #{tpu_custom_call.1} parent=11 // pred_check_branch
          %362 = sbr.rel (%p360) target = $region40
        $region39: #{tpu_custom_call.1} parent=11 // pred_region
          %s364 = ssub.s32 1024, 1024
          %365 = vsyncadd [#allocation13], %s364
          %s366 = sshll.u32 [#allocation14], 4
          %s367 = int_to_ptr.vmem [resolvable:$true] %s366
          %372 = dma.hbm_to_vmem [thread:$0]  %s8, 1024, %s367, [#allocation13], 64, 64, 4
        $region40: #{tpu_custom_call.1} parent=11 // pred_fallthru
          _
        // Predicated region
        $region41: #{tpu_custom_call.1} parent=11 // pred_check
          %p373 = pneg %p261
        $region42: #{tpu_custom_call.1} parent=11 // pred_check_branch
          %375 = sbr.rel (%p373) target = $region44
        $region43: #{tpu_custom_call.1} parent=11 // pred_region
          _
        $region44: #{tpu_custom_call.1} parent=11 // pred_fallthru
          _
      $region12: #{tpu_custom_call.1} parent=5 // pred_fallthru
        _
      %p376 = scmp.lt.s32.totalorder %s27, 6
      // Predicated region
      $region45: #{tpu_custom_call.1} parent=5 // pred_check
        %p377 = pneg %p376
      $region46: #{tpu_custom_call.1} parent=5 // pred_check_branch
        %379 = sbr.rel (%p377) target = $region48
      $region47: #{tpu_custom_call.1} parent=5 // pred_region
        // Predicated region
        $region49: #{tpu_custom_call.1} parent=47 // pred_check
          %p380 = pneg %p61
        $region50: #{tpu_custom_call.1} parent=47 // pred_check_branch
          %382 = sbr.rel (%p380) target = $region52
        $region51: #{tpu_custom_call.1} parent=47 // pred_region
          %s383 = sand.u32 %s51, 1
          %s384 = scalar_lea.sflag [#allocation4], %s383
          %s385 = sand.u32 %s51, 1
          %s386 = smul.addr %s385, 16
          %s387 = scalar_lea.vmem [#allocation3], %s386
          %s388 = smul.u32 2, %s35
          %s390 = ssub.s32 256, 256
          %391 = vsyncadd %s384, %s390
          %s392 = smul.addr %s34, 6
          %s393 = sadd.s32 %s388, %s392
          %s394 = smul.addr %s393, 128
          %s395 = scalar_lea.hbm %s0, %s394
          %s397 = sshll.u32 %s387, 4
          %s398 = int_to_ptr.vmem [resolvable:$true] %s397
          %400 = dma.hbm_to_vmem [thread:$0]  %s395, 256, %s398, %s384
        $region52: #{tpu_custom_call.1} parent=47 // pred_fallthru
          _
        // Predicated region
        $region53: #{tpu_custom_call.1} parent=47 // pred_check
          %p401 = pneg %p87
        $region54: #{tpu_custom_call.1} parent=47 // pred_check_branch
          %403 = sbr.rel (%p401) target = $region56
        $region55: #{tpu_custom_call.1} parent=47 // pred_region
          %s404 = sand.u32 %s27, 1
          %s405 = scalar_lea.sflag [#allocation7], %s404
          %s406 = sand.u32 %s77, 1
          %s407 = smul.addr %s406, 128
          %s408 = scalar_lea.vmem [#allocation6], %s407
          %s409 = smul.u32 32, %s35
          %s411 = ssub.s32 2048, 2048
          %412 = vsyncadd %s405, %s411
          %s413 = smul.addr %s409, 64
          %s414 = scalar_lea.hbm %s1, %s413
          %s415 = sshll.u32 %s408, 4
          %s416 = int_to_ptr.vmem [resolvable:$true] %s415
          %421 = dma.hbm_to_vmem [thread:$0]  %s414, 2048, %s416, %s405, 64, 64, 4
        $region56: #{tpu_custom_call.1} parent=47 // pred_fallthru
          _
      $region48: #{tpu_custom_call.1} parent=5 // pred_fallthru
        _
      %p422 = scmp.le.s32.totalorder 1, %s27
      %p423 = scmp.lt.s32.totalorder %s27, 7
      %p424 = pnand %p422, %p423
      %p425 = pneg %p424
      // Predicated region
      $region57: #{tpu_custom_call.1} parent=5 // pred_check
        _
      $region58: #{tpu_custom_call.1} parent=5 // pred_check_branch
        %427 = sbr.rel (%p424) target = $region60
      $region59: #{tpu_custom_call.1} parent=5 // pred_region
        %s428 = ssub.s32 %s27, 1
        %s429 = sand.u32 %s54, 1
        %s430 = scalar_lea.sflag [#allocation4], %s429
        %s431 = sand.u32 %s54, 1
        %s432 = smul.addr %s431, 16
        %s433 = scalar_lea.vmem [#allocation3], %s432
        // Predicated region
        $region61: #{tpu_custom_call.1} parent=59 // pred_check
          %p434 = pneg %p67
        $region62: #{tpu_custom_call.1} parent=59 // pred_check_branch
          %436 = sbr.rel (%p434) target = $region64
        $region63: #{tpu_custom_call.1} parent=59 // pred_region
          %437 = dma.done %s430, 256
        $region64: #{tpu_custom_call.1} parent=59 // pred_fallthru
          _
        %s438 = sand.u32 %s32, 1
        %s439 = scalar_lea.sflag [#allocation7], %s438
        %s440 = sand.u32 %s80, 1
        %s441 = smul.addr %s440, 128
        %s442 = scalar_lea.vmem [#allocation6], %s441
        // Predicated region
        $region65: #{tpu_custom_call.1} parent=59 // pred_check
          %p443 = pneg %p93
        $region66: #{tpu_custom_call.1} parent=59 // pred_check_branch
          %445 = sbr.rel (%p443) target = $region68
        $region67: #{tpu_custom_call.1} parent=59 // pred_region
          %446 = dma.done %s439, 2048
        $region68: #{tpu_custom_call.1} parent=59 // pred_fallthru
          _
        // Predicated region
        $region69: #{tpu_custom_call.1} parent=59 // pred_check
          %p447 = pneg %p135
        $region70: #{tpu_custom_call.1} parent=59 // pred_check_branch
          %449 = sbr.rel (%p447) target = $region72
        $region71: #{tpu_custom_call.1} parent=59 // pred_region
          %450 = dma.done [#allocation7], 1024
        $region72: #{tpu_custom_call.1} parent=59 // pred_fallthru
          _
        // Predicated region
        $region73: #{tpu_custom_call.1} parent=59 // pred_check
          %p451 = pneg %p156
        $region74: #{tpu_custom_call.1} parent=59 // pred_check_branch
          %453 = sbr.rel (%p451) target = $region76
        $region75: #{tpu_custom_call.1} parent=59 // pred_region
          %454 = dma.done [#allocation10], 2048
        $region76: #{tpu_custom_call.1} parent=59 // pred_fallthru
          _
        // Predicated region
        $region77: #{tpu_custom_call.1} parent=59 // pred_check
          %p455 = pneg %p177
        $region78: #{tpu_custom_call.1} parent=59 // pred_check_branch
          %457 = sbr.rel (%p455) target = $region80
        $region79: #{tpu_custom_call.1} parent=59 // pred_region
          %458 = dma.done [#allocation10], 1024
        $region80: #{tpu_custom_call.1} parent=59 // pred_fallthru
          _
        // Predicated region
        $region81: #{tpu_custom_call.1} parent=59 // pred_check
          %p459 = pneg %p198
        $region82: #{tpu_custom_call.1} parent=59 // pred_check_branch
          %461 = sbr.rel (%p459) target = $region84
        $region83: #{tpu_custom_call.1} parent=59 // pred_region
          %462 = dma.done [#allocation13], 1024
        $region84: #{tpu_custom_call.1} parent=59 // pred_fallthru
          _
        // Predicated region
        $region85: #{tpu_custom_call.1} parent=59 // pred_check
          %p463 = pneg %p240
        $region86: #{tpu_custom_call.1} parent=59 // pred_check_branch
          %465 = sbr.rel (%p463) target = $region88
        $region87: #{tpu_custom_call.1} parent=59 // pred_region
          %466 = dma.done [#allocation13], 1024
        $region88: #{tpu_custom_call.1} parent=59 // pred_fallthru
          _
        %s467 = sand.u32 %s54, 1
        %s468 = scalar_lea.sflag [#allocation4], %s467
        %s469 = sand.u32 %s54, 1
        %s470 = smul.addr %s469, 16
        %s471 = scalar_lea.vmem [#allocation3], %s470
        %p472 = pneg %p67
        %p473 = pneg %p64
        %s474 = sand.u32 %s32, 1
        %s475 = scalar_lea.sflag [#allocation7], %s474
        %s476 = sand.u32 %s80, 1
        %s477 = smul.addr %s476, 128
        %s478 = scalar_lea.vmem [#allocation6], %s477
        %p479 = pneg %p93
        %p480 = pneg %p90
        %p481 = pneg %p114
        %p482 = pneg %p111
        %p483 = pneg %p135
        %p484 = pneg %p132
        %p485 = pneg %p156
        %p486 = pneg %p153
        %p487 = pneg %p177
        %p488 = pneg %p174
        %p489 = pneg %p198
        %p490 = pneg %p195
        %p491 = pneg %p219
        %p492 = pneg %p216
        %p493 = pneg %p240
        %p494 = pneg %p237
        %p495 = pneg %p261
        %p496 = pneg %p258
        %p497 = pneg %p287
        %p498 = pneg %p284
        %s499 = sand.u32 %s274, 1
        %s500 = scalar_lea.sflag [#allocation5], %s499
        %s501 = sand.u32 %s274, 1
        %s502 = smul.addr %s501, 8
        %s503 = scalar_lea.vmem [#allocation15], %s502
        %s504 = smul.u32 2, %s37
        %s505 = smul.u32 32, %s37
        %p507 = scmp.eq.s32.totalorder %s37, 0
        // Predicated region
        $region89: #{tpu_custom_call.1} parent=59 // pred_check
          %p508 = pneg %p507
        $region90: #{tpu_custom_call.1} parent=59 // pred_check_branch
          %510 = sbr.rel (%p508) target = $region92
        $region91: #{tpu_custom_call.1} parent=59 // pred_region
          %511 = vst [vmem:[#allocation2] sm:$0xff] 0.0
        $region92: #{tpu_custom_call.1} parent=59 // pred_fallthru
          _
        %v512 = vld [vmem:[%s433] sm:$0xff]
        %v513 = vld [vmem:[%s433 + $0x8] sm:$0xff]
        %v514 = vpack.c.bf16 %v512, %v512
        %v515 = vpack.c.bf16 %v513, %v513
        %v516 = vld [vmem:[#allocation2] sm:$0xff]
        %v517 = vld [vmem:[%s442] sm:$0xf]
        %v518 = vld [vmem:[%s442 + $0x4] sm:$0xf]
        %v519 = vld [vmem:[%s442 + $0x8] sm:$0xf]
        %v520 = vld [vmem:[%s442 + $0xc] sm:$0xf]
        %v521 = vld [vmem:[%s442 + $0x10] sm:$0xf]
        %v522 = vld [vmem:[%s442 + $0x14] sm:$0xf]
        %v523 = vld [vmem:[%s442 + $0x18] sm:$0xf]
        %v524 = vld [vmem:[%s442 + $0x1c] sm:$0xf]
        %v525 = vld [vmem:[%s442 + $0x20] sm:$0xf]
        %v526 = vld [vmem:[%s442 + $0x24] sm:$0xf]
        %v527 = vld [vmem:[%s442 + $0x28] sm:$0xf]
        %v528 = vld [vmem:[%s442 + $0x2c] sm:$0xf]
        %v529 = vld [vmem:[%s442 + $0x30] sm:$0xf]
        %v530 = vld [vmem:[%s442 + $0x34] sm:$0xf]
        %v531 = vld [vmem:[%s442 + $0x38] sm:$0xf]
        %v532 = vld [vmem:[%s442 + $0x3c] sm:$0xf]
        %v533 = vld [vmem:[%s442 + $0x40] sm:$0xf]
        %v534 = vld [vmem:[%s442 + $0x44] sm:$0xf]
        %v535 = vld [vmem:[%s442 + $0x48] sm:$0xf]
        %v536 = vld [vmem:[%s442 + $0x4c] sm:$0xf]
        %v537 = vld [vmem:[%s442 + $0x50] sm:$0xf]
        %v538 = vld [vmem:[%s442 + $0x54] sm:$0xf]
        %v539 = vld [vmem:[%s442 + $0x58] sm:$0xf]
        %v540 = vld [vmem:[%s442 + $0x5c] sm:$0xf]
        %v541 = vld [vmem:[%s442 + $0x60] sm:$0xf]
        %v542 = vld [vmem:[%s442 + $0x64] sm:$0xf]
        %v543 = vld [vmem:[%s442 + $0x68] sm:$0xf]
        %v544 = vld [vmem:[%s442 + $0x6c] sm:$0xf]
        %v545 = vld [vmem:[%s442 + $0x70] sm:$0xf]
        %v546 = vld [vmem:[%s442 + $0x74] sm:$0xf]
        %v547 = vld [vmem:[%s442 + $0x78] sm:$0xf]
        %v548 = vld [vmem:[%s442 + $0x7c] sm:$0xf]
        %v581 = vunpack.c.l.b16 %v517
        %v582 = vunpack.c.l.b16 %v518
        %v583 = vunpack.c.l.b16 %v519
        %v584 = vunpack.c.l.b16 %v520
        %v585 = vunpack.c.l.b16 %v521
        %v586 = vunpack.c.l.b16 %v522
        %v587 = vunpack.c.l.b16 %v523
        %v588 = vunpack.c.l.b16 %v524
        %v589 = vunpack.c.l.b16 %v525
        %v590 = vunpack.c.l.b16 %v526
        %v591 = vunpack.c.l.b16 %v527
        %v592 = vunpack.c.l.b16 %v528
        %v593 = vunpack.c.l.b16 %v529
        %v594 = vunpack.c.l.b16 %v530
        %v595 = vunpack.c.l.b16 %v531
        %v596 = vunpack.c.l.b16 %v532
        %v597 = vunpack.c.l.b16 %v533
        %v598 = vunpack.c.l.b16 %v534
        %v599 = vunpack.c.l.b16 %v535
        %v600 = vunpack.c.l.b16 %v536
        %v601 = vunpack.c.l.b16 %v537
        %v602 = vunpack.c.l.b16 %v538
        %v603 = vunpack.c.l.b16 %v539
        %v604 = vunpack.c.l.b16 %v540
        %v605 = vunpack.c.l.b16 %v541
        %v606 = vunpack.c.l.b16 %v542
        %v607 = vunpack.c.l.b16 %v543
        %v608 = vunpack.c.l.b16 %v544
        %v609 = vunpack.c.l.b16 %v545
        %v610 = vunpack.c.l.b16 %v546
        %v611 = vunpack.c.l.b16 %v547
        %v612 = vunpack.c.l.b16 %v548
        %v613 = vpack.c.b16 %v582, %v581
        %v614 = vpack.c.b16 %v584, %v583
        %v615 = vpack.c.b16 %v586, %v585
        %v616 = vpack.c.b16 %v588, %v587
        %v617 = vpack.c.b16 %v590, %v589
        %v618 = vpack.c.b16 %v592, %v591
        %v619 = vpack.c.b16 %v594, %v593
        %v620 = vpack.c.b16 %v596, %v595
        %v621 = vpack.c.b16 %v598, %v597
        %v622 = vpack.c.b16 %v600, %v599
        %v623 = vpack.c.b16 %v602, %v601
        %v624 = vpack.c.b16 %v604, %v603
        %v625 = vpack.c.b16 %v606, %v605
        %v626 = vpack.c.b16 %v608, %v607
        %v627 = vpack.c.b16 %v610, %v609
        %v628 = vpack.c.b16 %v612, %v611
        %645 = vmatprep.subr.bf16.mxu0 0
        %646 = vmatpush1.bf16.msra.mxu0 %v620
        %647 = vmatprep.subr.bf16.mxu0 0
        %648 = vmatpush1.bf16.msra.mxu0 %v619
        %649 = vmatprep.subr.bf16.mxu0 0
        %650 = vmatpush1.bf16.msra.mxu0 %v618
        %651 = vmatprep.subr.bf16.mxu0 0
        %652 = vmatpush1.bf16.msra.mxu0 %v617
        %653 = vmatprep.subr.bf16.mxu0 0
        %654 = vmatpush1.bf16.msra.mxu0 %v616
        %655 = vmatprep.subr.bf16.mxu0 0
        %656 = vmatpush1.bf16.msra.mxu0 %v615
        %657 = vmatprep.subr.bf16.mxu0 0
        %658 = vmatpush1.bf16.msra.mxu0 %v614
        %659 = vmatprep.subr.bf16.mxu0 0
        %660 = vmatpush1.bf16.msra.mxu0 %v613
        %661 = vmatprep.subr.bf16.mxu0 0
        %662 = vmatpush2.bf16.msra.mxu0 %v628
        %663 = vmatprep.subr.bf16.mxu0 0
        %664 = vmatpush2.bf16.msra.mxu0 %v627
        %665 = vmatprep.subr.bf16.mxu0 0
        %666 = vmatpush2.bf16.msra.mxu0 %v626
        %667 = vmatprep.subr.bf16.mxu0 0
        %668 = vmatpush2.bf16.msra.mxu0 %v625
        %669 = vmatprep.subr.bf16.mxu0 0
        %670 = vmatpush2.bf16.msra.mxu0 %v624
        %671 = vmatprep.subr.bf16.mxu0 0
        %672 = vmatpush2.bf16.msra.mxu0 %v623
        %673 = vmatprep.subr.bf16.mxu0 0
        %674 = vmatpush2.bf16.msra.mxu0 %v622
        %675 = vmatprep.subr.bf16.mxu0 0
        %676 = vmatpush2.bf16.msra.mxu0 %v621
        %677 = vmatprep.mubr.bf16.mxu0 %v515
        %678 = vmatmul.mubr.bf16.gmra.mxu0 %v514
        %v679 = vpop.f32.mrf.mxu0
        %v680 = vadd.f32 0.0, %v679
        %v681 = vpop.f32.mrf.mxu0
        %v682 = vpop.f32.mrf.mxu0
        %v683 = vpop.f32.mrf.mxu0
        %684 = vdwg.mxu0
        %v685 = vadd.f32 %v516, %v680
        %686 = vst [vmem:[#allocation2] sm:$0xff] %v685
        %p687 = scmp.eq.s32.totalorder %s37, 2
        // Predicated region
        $region93: #{tpu_custom_call.1} parent=59 // pred_check
          %p688 = pneg %p687
        $region94: #{tpu_custom_call.1} parent=59 // pred_check_branch
          %690 = sbr.rel (%p688) target = $region96
        $region95: #{tpu_custom_call.1} parent=59 // pred_region
          %v691 = vld [vmem:[#allocation2] sm:$0xff]
          %v692 = vld [vmem:[%s2] sm:$0x1]
          %v694 = vlaneseq
          %v695 = vshrl.u32 %v694, 7
          %v696 = vsub.s32 0, %v695
          %v697 = vrot.slane %v692, %v696
          %v699 = vadd.f32 %v691, %v697
          %v700 = vpack.c.bf16 %v699, %v699
          %v701 = vld [vmem:[#allocation9] sm:$0xff]
          %v702 = vld [vmem:[#allocation9 + $0x8] sm:$0xff]
          %v703 = vld [vmem:[#allocation9 + $0x10] sm:$0xff]
          %v704 = vld [vmem:[#allocation9 + $0x18] sm:$0xff]
          %v705 = vld [vmem:[#allocation9 + $0x20] sm:$0xff]
          %v706 = vld [vmem:[#allocation9 + $0x28] sm:$0xff]
          %v707 = vld [vmem:[#allocation9 + $0x30] sm:$0xff]
          %v708 = vld [vmem:[#allocation9 + $0x38] sm:$0xff]
          %v709 = vld [vmem:[#allocation9 + $0x40] sm:$0xff]
          %v710 = vld [vmem:[#allocation9 + $0x48] sm:$0xff]
          %v711 = vld [vmem:[#allocation9 + $0x50] sm:$0xff]
          %v712 = vld [vmem:[#allocation9 + $0x58] sm:$0xff]
          %v713 = vld [vmem:[#allocation9 + $0x60] sm:$0xff]
          %v714 = vld [vmem:[#allocation9 + $0x68] sm:$0xff]
          %v715 = vld [vmem:[#allocation9 + $0x70] sm:$0xff]
          %v716 = vld [vmem:[#allocation9 + $0x78] sm:$0xff]
          %v733 = vunpack.c.l.b16 %v701
          %v734 = vunpack.c.h.b16 %v701
          %v735 = vunpack.c.l.b16 %v702
          %v736 = vunpack.c.h.b16 %v702
          %v737 = vunpack.c.l.b16 %v703
          %v738 = vunpack.c.h.b16 %v703
          %v739 = vunpack.c.l.b16 %v704
          %v740 = vunpack.c.h.b16 %v704
          %v741 = vunpack.c.l.b16 %v705
          %v742 = vunpack.c.h.b16 %v705
          %v743 = vunpack.c.l.b16 %v706
          %v744 = vunpack.c.h.b16 %v706
          %v745 = vunpack.c.l.b16 %v707
          %v746 = vunpack.c.h.b16 %v707
          %v747 = vunpack.c.l.b16 %v708
          %v748 = vunpack.c.h.b16 %v708
          %v749 = vunpack.c.l.b16 %v709
          %v750 = vunpack.c.h.b16 %v709
          %v751 = vunpack.c.l.b16 %v710
          %v752 = vunpack.c.h.b16 %v710
          %v753 = vunpack.c.l.b16 %v711
          %v754 = vunpack.c.h.b16 %v711
          %v755 = vunpack.c.l.b16 %v712
          %v756 = vunpack.c.h.b16 %v712
          %v757 = vunpack.c.l.b16 %v713
          %v758 = vunpack.c.h.b16 %v713
          %v759 = vunpack.c.l.b16 %v714
          %v760 = vunpack.c.h.b16 %v714
          %v761 = vunpack.c.l.b16 %v715
          %v762 = vunpack.c.h.b16 %v715
          %v763 = vunpack.c.l.b16 %v716
          %v764 = vunpack.c.h.b16 %v716
          %v765 = vpack.c.b16 %v735, %v733
          %v766 = vpack.c.b16 %v736, %v734
          %v767 = vpack.c.b16 %v739, %v737
          %v768 = vpack.c.b16 %v740, %v738
          %v769 = vpack.c.b16 %v743, %v741
          %v770 = vpack.c.b16 %v744, %v742
          %v771 = vpack.c.b16 %v747, %v745
          %v772 = vpack.c.b16 %v748, %v746
          %v773 = vpack.c.b16 %v751, %v749
          %v774 = vpack.c.b16 %v752, %v750
          %v775 = vpack.c.b16 %v755, %v753
          %v776 = vpack.c.b16 %v756, %v754
          %v777 = vpack.c.b16 %v759, %v757
          %v778 = vpack.c.b16 %v760, %v758
          %v779 = vpack.c.b16 %v763, %v761
          %v780 = vpack.c.b16 %v764, %v762
          %797 = vmatprep.subr.bf16.mxu0 %v780
          %798 = vmatpush1.bf16.msra.mxu0 %v779
          %799 = vmatprep.subr.bf16.mxu0 %v778
          %800 = vmatpush1.bf16.msra.mxu0 %v777
          %801 = vmatprep.subr.bf16.mxu0 %v776
          %802 = vmatpush1.bf16.msra.mxu0 %v775
          %803 = vmatprep.subr.bf16.mxu0 %v774
          %804 = vmatpush1.bf16.msra.mxu0 %v773
          %805 = vmatprep.subr.bf16.mxu0 %v772
          %806 = vmatpush1.bf16.msra.mxu0 %v771
          %807 = vmatprep.subr.bf16.mxu0 %v770
          %808 = vmatpush1.bf16.msra.mxu0 %v769
          %809 = vmatprep.subr.bf16.mxu0 %v768
          %810 = vmatpush1.bf16.msra.mxu0 %v767
          %811 = vmatprep.subr.bf16.mxu0 %v766
          %812 = vmatpush1.bf16.msra.mxu0 %v765
          %813 = vmatprep.subr.bf16.mxu0 0
          %814 = vmatpush2.bf16.msra.mxu0 0
          %815 = vmatprep.subr.bf16.mxu0 0
          %816 = vmatpush2.bf16.msra.mxu0 0
          %817 = vmatprep.subr.bf16.mxu0 0
          %818 = vmatpush2.bf16.msra.mxu0 0
          %819 = vmatprep.subr.bf16.mxu0 0
          %820 = vmatpush2.bf16.msra.mxu0 0
          %821 = vmatprep.subr.bf16.mxu0 0
          %822 = vmatpush2.bf16.msra.mxu0 0
          %823 = vmatprep.subr.bf16.mxu0 0
          %824 = vmatpush2.bf16.msra.mxu0 0
          %825 = vmatprep.subr.bf16.mxu0 0
          %826 = vmatpush2.bf16.msra.mxu0 0
          %827 = vmatprep.subr.bf16.mxu0 0
          %828 = vmatpush2.bf16.msra.mxu0 0
          %829 = vmatprep.mubr.bf16.mxu0 0
          %830 = vmatmul.mubr.bf16.gmra.mxu0 %v700
          %v831 = vpop.f32.mrf.mxu0
          %v832 = vadd.f32 0.0, %v831
          %v833 = vpop.f32.mrf.mxu0
          %v834 = vadd.f32 0.0, %v833
          %v835 = vpop.f32.mrf.mxu0
          %v836 = vpop.f32.mrf.mxu0
          %837 = vdwg.mxu0
          %v838 = vld [vmem:[#allocation8] sm:$0xf]
          %v839 = vld [vmem:[#allocation8 + $0x4] sm:$0xf]
          %v840 = vld [vmem:[#allocation8 + $0x8] sm:$0xf]
          %v841 = vld [vmem:[#allocation8 + $0xc] sm:$0xf]
          %v842 = vld [vmem:[#allocation8 + $0x10] sm:$0xf]
          %v843 = vld [vmem:[#allocation8 + $0x14] sm:$0xf]
          %v844 = vld [vmem:[#allocation8 + $0x18] sm:$0xf]
          %v845 = vld [vmem:[#allocation8 + $0x1c] sm:$0xf]
          %v846 = vld [vmem:[#allocation8 + $0x20] sm:$0xf]
          %v847 = vld [vmem:[#allocation8 + $0x24] sm:$0xf]
          %v848 = vld [vmem:[#allocation8 + $0x28] sm:$0xf]
          %v849 = vld [vmem:[#allocation8 + $0x2c] sm:$0xf]
          %v850 = vld [vmem:[#allocation8 + $0x30] sm:$0xf]
          %v851 = vld [vmem:[#allocation8 + $0x34] sm:$0xf]
          %v852 = vld [vmem:[#allocation8 + $0x38] sm:$0xf]
          %v853 = vld [vmem:[#allocation8 + $0x3c] sm:$0xf]
          %v870 = vunpack.c.l.b16 %v838
          %v871 = vunpack.c.l.b16 %v839
          %v872 = vunpack.c.l.b16 %v840
          %v873 = vunpack.c.l.b16 %v841
          %v874 = vunpack.c.l.b16 %v842
          %v875 = vunpack.c.l.b16 %v843
          %v876 = vunpack.c.l.b16 %v844
          %v877 = vunpack.c.l.b16 %v845
          %v878 = vunpack.c.l.b16 %v846
          %v879 = vunpack.c.l.b16 %v847
          %v880 = vunpack.c.l.b16 %v848
          %v881 = vunpack.c.l.b16 %v849
          %v882 = vunpack.c.l.b16 %v850
          %v883 = vunpack.c.l.b16 %v851
          %v884 = vunpack.c.l.b16 %v852
          %v885 = vunpack.c.l.b16 %v853
          %v886 = vpack.c.b16 %v871, %v870
          %v887 = vpack.c.b16 %v873, %v872
          %v888 = vpack.c.b16 %v875, %v874
          %v889 = vpack.c.b16 %v877, %v876
          %v890 = vpack.c.b16 %v879, %v878
          %v891 = vpack.c.b16 %v881, %v880
          %v892 = vpack.c.b16 %v883, %v882
          %v893 = vpack.c.b16 %v885, %v884
          %902 = vmatprep.subr.bf16.mxu0 0
          %903 = vmatpush1.bf16.msra.mxu0 %v893
          %904 = vmatprep.subr.bf16.mxu0 0
          %905 = vmatpush1.bf16.msra.mxu0 %v892
          %906 = vmatprep.subr.bf16.mxu0 0
          %907 = vmatpush1.bf16.msra.mxu0 %v891
          %908 = vmatprep.subr.bf16.mxu0 0
          %909 = vmatpush1.bf16.msra.mxu0 %v890
          %910 = vmatprep.subr.bf16.mxu0 0
          %911 = vmatpush1.bf16.msra.mxu0 %v889
          %912 = vmatprep.subr.bf16.mxu0 0
          %913 = vmatpush1.bf16.msra.mxu0 %v888
          %914 = vmatprep.subr.bf16.mxu0 0
          %915 = vmatpush1.bf16.msra.mxu0 %v887
          %916 = vmatprep.subr.bf16.mxu0 0
          %917 = vmatpush1.bf16.msra.mxu0 %v886
          %918 = vmatprep.subr.bf16.mxu0 0
          %919 = vmatpush2.bf16.msra.mxu0 0
          %920 = vmatprep.subr.bf16.mxu0 0
          %921 = vmatpush2.bf16.msra.mxu0 0
          %922 = vmatprep.subr.bf16.mxu0 0
          %923 = vmatpush2.bf16.msra.mxu0 0
          %924 = vmatprep.subr.bf16.mxu0 0
          %925 = vmatpush2.bf16.msra.mxu0 0
          %926 = vmatprep.subr.bf16.mxu0 0
          %927 = vmatpush2.bf16.msra.mxu0 0
          %928 = vmatprep.subr.bf16.mxu0 0
          %929 = vmatpush2.bf16.msra.mxu0 0
          %930 = vmatprep.subr.bf16.mxu0 0
          %931 = vmatpush2.bf16.msra.mxu0 0
          %932 = vmatprep.subr.bf16.mxu0 0
          %933 = vmatpush2.bf16.msra.mxu0 0
          %934 = vmatprep.mubr.bf16.mxu0 0
          %935 = vmatmul.mubr.bf16.gmra.mxu0 %v700
          %v936 = vpop.f32.mrf.mxu0
          %v937 = vadd.f32 0.0, %v936
          %v938 = vpop.f32.mrf.mxu0
          %v939 = vpop.f32.mrf.mxu0
          %v940 = vpop.f32.mrf.mxu0
          %941 = vdwg.mxu0
          %v942 = vlaneseq
          %v943 = vshrl.u32 %v942, 7
          %v944 = vsub.s32 0, %v943
          %v945 = vrot.slane %v937, %v944
          %v946 = vmul.f32 %v945, %v832
          %947 = vadd.xlane.f32.xlu0 %v946
          %v948 = vpop.xlane.xlu0 %947
          %v949 = vrot.slane %v948, 4
          %v950 = vmax.f32 %v948, %v949
          %v951 = vrot.slane %v950, 2
          %v952 = vmax.f32 %v950, %v951
          %v953 = vrot.slane %v952, 1
          %v954 = vmax.f32 %v952, %v953
          %v955 = vsub.f32 %v948, %v954
          %v956 = vmul.f32 %v955, 1.442695
          %v957 = vpow.pop %v956
          %v958 = vrot.slane %v957, 4
          %v959 = vadd.f32 %v957, %v958
          %v960 = vrot.slane %v959, 2
          %v961 = vadd.f32 %v959, %v960
          %v962 = vrot.slane %v961, 1
          %v963 = vadd.f32 %v961, %v962
          %v964 = vrcp.pop %v963
          %v965 = vmul.f32 %v957, %v964
          %v966 = vmul.f32 %v965, %v834
          %v967 = vrot.slane %v966, 4
          %v968 = vadd.f32 %v966, %v967
          %v969 = vrot.slane %v968, 2
          %v970 = vadd.f32 %v968, %v969
          %v971 = vrot.slane %v970, 1
          %v972 = vadd.f32 %v970, %v971
          %v973 = vpack.c.bf16 %v972, %v972
          %v974 = vld [vmem:[#allocation11] sm:$0xf]
          %v975 = vld [vmem:[#allocation11 + $0x4] sm:$0xf]
          %v976 = vld [vmem:[#allocation11 + $0x8] sm:$0xf]
          %v977 = vld [vmem:[#allocation11 + $0xc] sm:$0xf]
          %v978 = vld [vmem:[#allocation11 + $0x10] sm:$0xf]
          %v979 = vld [vmem:[#allocation11 + $0x14] sm:$0xf]
          %v980 = vld [vmem:[#allocation11 + $0x18] sm:$0xf]
          %v981 = vld [vmem:[#allocation11 + $0x1c] sm:$0xf]
          %v982 = vld [vmem:[#allocation11 + $0x20] sm:$0xf]
          %v983 = vld [vmem:[#allocation11 + $0x24] sm:$0xf]
          %v984 = vld [vmem:[#allocation11 + $0x28] sm:$0xf]
          %v985 = vld [vmem:[#allocation11 + $0x2c] sm:$0xf]
          %v986 = vld [vmem:[#allocation11 + $0x30] sm:$0xf]
          %v987 = vld [vmem:[#allocation11 + $0x34] sm:$0xf]
          %v988 = vld [vmem:[#allocation11 + $0x38] sm:$0xf]
          %v989 = vld [vmem:[#allocation11 + $0x3c] sm:$0xf]
          %v1006 = vunpack.c.l.b16 %v974
          %v1007 = vunpack.c.l.b16 %v975
          %v1008 = vunpack.c.l.b16 %v976
          %v1009 = vunpack.c.l.b16 %v977
          %v1010 = vunpack.c.l.b16 %v978
          %v1011 = vunpack.c.l.b16 %v979
          %v1012 = vunpack.c.l.b16 %v980
          %v1013 = vunpack.c.l.b16 %v981
          %v1014 = vunpack.c.l.b16 %v982
          %v1015 = vunpack.c.l.b16 %v983
          %v1016 = vunpack.c.l.b16 %v984
          %v1017 = vunpack.c.l.b16 %v985
          %v1018 = vunpack.c.l.b16 %v986
          %v1019 = vunpack.c.l.b16 %v987
          %v1020 = vunpack.c.l.b16 %v988
          %v1021 = vunpack.c.l.b16 %v989
          %v1022 = vpack.c.b16 %v1007, %v1006
          %v1023 = vpack.c.b16 %v1009, %v1008
          %v1024 = vpack.c.b16 %v1011, %v1010
          %v1025 = vpack.c.b16 %v1013, %v1012
          %v1026 = vpack.c.b16 %v1015, %v1014
          %v1027 = vpack.c.b16 %v1017, %v1016
          %v1028 = vpack.c.b16 %v1019, %v1018
          %v1029 = vpack.c.b16 %v1021, %v1020
          %1038 = vmatprep.subr.bf16.mxu0 0
          %1039 = vmatpush1.bf16.msra.mxu0 %v1029
          %1040 = vmatprep.subr.bf16.mxu0 0
          %1041 = vmatpush1.bf16.msra.mxu0 %v1028
          %1042 = vmatprep.subr.bf16.mxu0 0
          %1043 = vmatpush1.bf16.msra.mxu0 %v1027
          %1044 = vmatprep.subr.bf16.mxu0 0
          %1045 = vmatpush1.bf16.msra.mxu0 %v1026
          %1046 = vmatprep.subr.bf16.mxu0 0
          %1047 = vmatpush1.bf16.msra.mxu0 %v1025
          %1048 = vmatprep.subr.bf16.mxu0 0
          %1049 = vmatpush1.bf16.msra.mxu0 %v1024
          %1050 = vmatprep.subr.bf16.mxu0 0
          %1051 = vmatpush1.bf16.msra.mxu0 %v1023
          %1052 = vmatprep.subr.bf16.mxu0 0
          %1053 = vmatpush1.bf16.msra.mxu0 %v1022
          %1054 = vmatprep.subr.bf16.mxu0 0
          %1055 = vmatpush2.bf16.msra.mxu0 0
          %1056 = vmatprep.subr.bf16.mxu0 0
          %1057 = vmatpush2.bf16.msra.mxu0 0
          %1058 = vmatprep.subr.bf16.mxu0 0
          %1059 = vmatpush2.bf16.msra.mxu0 0
          %1060 = vmatprep.subr.bf16.mxu0 0
          %1061 = vmatpush2.bf16.msra.mxu0 0
          %1062 = vmatprep.subr.bf16.mxu0 0
          %1063 = vmatpush2.bf16.msra.mxu0 0
          %1064 = vmatprep.subr.bf16.mxu0 0
          %1065 = vmatpush2.bf16.msra.mxu0 0
          %1066 = vmatprep.subr.bf16.mxu0 0
          %1067 = vmatpush2.bf16.msra.mxu0 0
          %1068 = vmatprep.subr.bf16.mxu0 0
          %1069 = vmatpush2.bf16.msra.mxu0 0
          %1070 = vmatprep.mubr.bf16.mxu0 0
          %1071 = vmatmul.mubr.bf16.gmra.mxu0 %v973
          %v1072 = vpop.f32.mrf.mxu0
          %v1073 = vadd.f32 0.0, %v1072
          %v1074 = vpop.f32.mrf.mxu0
          %v1075 = vpop.f32.mrf.mxu0
          %v1076 = vpop.f32.mrf.mxu0
          %1077 = vdwg.mxu0
          %v1078 = vadd.f32 %v699, %v1073
          %v1079 = vlaneseq
          %v1080 = vshrl.u32 %v1079, 7
          %v1081 = vsub.s32 0, %v1080
          %v1082 = vrot.slane %v1078, %v1081
          %v1083 = vpack.c.bf16 %v1082, %v1082
          %v1084 = vld [vmem:[#allocation12] sm:$0xf]
          %v1085 = vld [vmem:[#allocation12 + $0x4] sm:$0xf]
          %v1086 = vld [vmem:[#allocation12 + $0x8] sm:$0xf]
          %v1087 = vld [vmem:[#allocation12 + $0xc] sm:$0xf]
          %v1088 = vld [vmem:[#allocation12 + $0x10] sm:$0xf]
          %v1089 = vld [vmem:[#allocation12 + $0x14] sm:$0xf]
          %v1090 = vld [vmem:[#allocation12 + $0x18] sm:$0xf]
          %v1091 = vld [vmem:[#allocation12 + $0x1c] sm:$0xf]
          %v1092 = vld [vmem:[#allocation12 + $0x20] sm:$0xf]
          %v1093 = vld [vmem:[#allocation12 + $0x24] sm:$0xf]
          %v1094 = vld [vmem:[#allocation12 + $0x28] sm:$0xf]
          %v1095 = vld [vmem:[#allocation12 + $0x2c] sm:$0xf]
          %v1096 = vld [vmem:[#allocation12 + $0x30] sm:$0xf]
          %v1097 = vld [vmem:[#allocation12 + $0x34] sm:$0xf]
          %v1098 = vld [vmem:[#allocation12 + $0x38] sm:$0xf]
          %v1099 = vld [vmem:[#allocation12 + $0x3c] sm:$0xf]
          %v1100 = vld [vmem:[%s7] sm:$0x1]
          %v1102 = vlaneseq
          %v1103 = vshrl.u32 %v1102, 7
          %v1104 = vsub.s32 0, %v1103
          %v1105 = vrot.slane %v1100, %v1104
          %v1123 = vunpack.c.l.b16 %v1084
          %v1124 = vunpack.c.l.b16 %v1085
          %v1125 = vunpack.c.l.b16 %v1086
          %v1126 = vunpack.c.l.b16 %v1087
          %v1127 = vunpack.c.l.b16 %v1088
          %v1128 = vunpack.c.l.b16 %v1089
          %v1129 = vunpack.c.l.b16 %v1090
          %v1130 = vunpack.c.l.b16 %v1091
          %v1131 = vunpack.c.l.b16 %v1092
          %v1132 = vunpack.c.l.b16 %v1093
          %v1133 = vunpack.c.l.b16 %v1094
          %v1134 = vunpack.c.l.b16 %v1095
          %v1135 = vunpack.c.l.b16 %v1096
          %v1136 = vunpack.c.l.b16 %v1097
          %v1137 = vunpack.c.l.b16 %v1098
          %v1138 = vunpack.c.l.b16 %v1099
          %v1139 = vpack.c.b16 %v1124, %v1123
          %v1140 = vpack.c.b16 %v1126, %v1125
          %v1141 = vpack.c.b16 %v1128, %v1127
          %v1142 = vpack.c.b16 %v1130, %v1129
          %v1143 = vpack.c.b16 %v1132, %v1131
          %v1144 = vpack.c.b16 %v1134, %v1133
          %v1145 = vpack.c.b16 %v1136, %v1135
          %v1146 = vpack.c.b16 %v1138, %v1137
          %1155 = vmatprep.subr.bf16.mxu0 0
          %1156 = vmatpush1.bf16.msra.mxu0 %v1146
          %1157 = vmatprep.subr.bf16.mxu0 0
          %1158 = vmatpush1.bf16.msra.mxu0 %v1145
          %1159 = vmatprep.subr.bf16.mxu0 0
          %1160 = vmatpush1.bf16.msra.mxu0 %v1144
          %1161 = vmatprep.subr.bf16.mxu0 0
          %1162 = vmatpush1.bf16.msra.mxu0 %v1143
          %1163 = vmatprep.subr.bf16.mxu0 0
          %1164 = vmatpush1.bf16.msra.mxu0 %v1142
          %1165 = vmatprep.subr.bf16.mxu0 0
          %1166 = vmatpush1.bf16.msra.mxu0 %v1141
          %1167 = vmatprep.subr.bf16.mxu0 0
          %1168 = vmatpush1.bf16.msra.mxu0 %v1140
          %1169 = vmatprep.subr.bf16.mxu0 0
          %1170 = vmatpush1.bf16.msra.mxu0 %v1139
          %1171 = vmatprep.subr.bf16.mxu0 0
          %1172 = vmatpush2.bf16.msra.mxu0 0
          %1173 = vmatprep.subr.bf16.mxu0 0
          %1174 = vmatpush2.bf16.msra.mxu0 0
          %1175 = vmatprep.subr.bf16.mxu0 0
          %1176 = vmatpush2.bf16.msra.mxu0 0
          %1177 = vmatprep.subr.bf16.mxu0 0
          %1178 = vmatpush2.bf16.msra.mxu0 0
          %1179 = vmatprep.subr.bf16.mxu0 0
          %1180 = vmatpush2.bf16.msra.mxu0 0
          %1181 = vmatprep.subr.bf16.mxu0 0
          %1182 = vmatpush2.bf16.msra.mxu0 0
          %1183 = vmatprep.subr.bf16.mxu0 0
          %1184 = vmatpush2.bf16.msra.mxu0 0
          %1185 = vmatprep.subr.bf16.mxu0 0
          %1186 = vmatpush2.bf16.msra.mxu0 0
          %1187 = vmatprep.mubr.bf16.mxu0 0
          %1188 = vmatmul.mubr.bf16.gmra.mxu0 %v1083
          %v1189 = vpop.f32.mrf.mxu0
          %v1190 = vadd.f32 %v1105, %v1189
          %v1191 = vpop.f32.mrf.mxu0
          %v1192 = vpop.f32.mrf.mxu0
          %v1193 = vpop.f32.mrf.mxu0
          %1194 = vdwg.mxu0
          %v1195 = vmax.f32 %v1190, 0.0
          %v1196 = vpack.c.bf16 %v1195, %v1195
          %v1197 = vld [vmem:[#allocation14] sm:$0xf]
          %v1198 = vld [vmem:[#allocation14 + $0x4] sm:$0xf]
          %v1199 = vld [vmem:[#allocation14 + $0x8] sm:$0xf]
          %v1200 = vld [vmem:[#allocation14 + $0xc] sm:$0xf]
          %v1201 = vld [vmem:[#allocation14 + $0x10] sm:$0xf]
          %v1202 = vld [vmem:[#allocation14 + $0x14] sm:$0xf]
          %v1203 = vld [vmem:[#allocation14 + $0x18] sm:$0xf]
          %v1204 = vld [vmem:[#allocation14 + $0x1c] sm:$0xf]
          %v1205 = vld [vmem:[#allocation14 + $0x20] sm:$0xf]
          %v1206 = vld [vmem:[#allocation14 + $0x24] sm:$0xf]
          %v1207 = vld [vmem:[#allocation14 + $0x28] sm:$0xf]
          %v1208 = vld [vmem:[#allocation14 + $0x2c] sm:$0xf]
          %v1209 = vld [vmem:[#allocation14 + $0x30] sm:$0xf]
          %v1210 = vld [vmem:[#allocation14 + $0x34] sm:$0xf]
          %v1211 = vld [vmem:[#allocation14 + $0x38] sm:$0xf]
          %v1212 = vld [vmem:[#allocation14 + $0x3c] sm:$0xf]
          %v1213 = vld [vmem:[%s9] sm:$0x1]
          %v1215 = vlaneseq
          %v1216 = vshrl.u32 %v1215, 7
          %v1217 = vsub.s32 0, %v1216
          %v1218 = vrot.slane %v1213, %v1217
          %v1236 = vunpack.c.l.b16 %v1197
          %v1237 = vunpack.c.l.b16 %v1198
          %v1238 = vunpack.c.l.b16 %v1199
          %v1239 = vunpack.c.l.b16 %v1200
          %v1240 = vunpack.c.l.b16 %v1201
          %v1241 = vunpack.c.l.b16 %v1202
          %v1242 = vunpack.c.l.b16 %v1203
          %v1243 = vunpack.c.l.b16 %v1204
          %v1244 = vunpack.c.l.b16 %v1205
          %v1245 = vunpack.c.l.b16 %v1206
          %v1246 = vunpack.c.l.b16 %v1207
          %v1247 = vunpack.c.l.b16 %v1208
          %v1248 = vunpack.c.l.b16 %v1209
          %v1249 = vunpack.c.l.b16 %v1210
          %v1250 = vunpack.c.l.b16 %v1211
          %v1251 = vunpack.c.l.b16 %v1212
          %v1252 = vpack.c.b16 %v1237, %v1236
          %v1253 = vpack.c.b16 %v1239, %v1238
          %v1254 = vpack.c.b16 %v1241, %v1240
          %v1255 = vpack.c.b16 %v1243, %v1242
          %v1256 = vpack.c.b16 %v1245, %v1244
          %v1257 = vpack.c.b16 %v1247, %v1246
          %v1258 = vpack.c.b16 %v1249, %v1248
          %v1259 = vpack.c.b16 %v1251, %v1250
          %1268 = vmatprep.subr.bf16.mxu0 0
          %1269 = vmatpush1.bf16.msra.mxu0 %v1259
          %1270 = vmatprep.subr.bf16.mxu0 0
          %1271 = vmatpush1.bf16.msra.mxu0 %v1258
          %1272 = vmatprep.subr.bf16.mxu0 0
          %1273 = vmatpush1.bf16.msra.mxu0 %v1257
          %1274 = vmatprep.subr.bf16.mxu0 0
          %1275 = vmatpush1.bf16.msra.mxu0 %v1256
          %1276 = vmatprep.subr.bf16.mxu0 0
          %1277 = vmatpush1.bf16.msra.mxu0 %v1255
          %1278 = vmatprep.subr.bf16.mxu0 0
          %1279 = vmatpush1.bf16.msra.mxu0 %v1254
          %1280 = vmatprep.subr.bf16.mxu0 0
          %1281 = vmatpush1.bf16.msra.mxu0 %v1253
          %1282 = vmatprep.subr.bf16.mxu0 0
          %1283 = vmatpush1.bf16.msra.mxu0 %v1252
          %1284 = vmatprep.subr.bf16.mxu0 0
          %1285 = vmatpush2.bf16.msra.mxu0 0
          %1286 = vmatprep.subr.bf16.mxu0 0
          %1287 = vmatpush2.bf16.msra.mxu0 0
          %1288 = vmatprep.subr.bf16.mxu0 0
          %1289 = vmatpush2.bf16.msra.mxu0 0
          %1290 = vmatprep.subr.bf16.mxu0 0
          %1291 = vmatpush2.bf16.msra.mxu0 0
          %1292 = vmatprep.subr.bf16.mxu0 0
          %1293 = vmatpush2.bf16.msra.mxu0 0
          %1294 = vmatprep.subr.bf16.mxu0 0
          %1295 = vmatpush2.bf16.msra.mxu0 0
          %1296 = vmatprep.subr.bf16.mxu0 0
          %1297 = vmatpush2.bf16.msra.mxu0 0
          %1298 = vmatprep.subr.bf16.mxu0 0
          %1299 = vmatpush2.bf16.msra.mxu0 0
          %1300 = vmatprep.mubr.bf16.mxu0 0
          %1301 = vmatmul.mubr.bf16.gmra.mxu0 %v1196
          %v1302 = vpop.f32.mrf.mxu0
          %v1303 = vadd.f32 %v1218, %v1302
          %v1304 = vpop.f32.mrf.mxu0
          %v1305 = vpop.f32.mrf.mxu0
          %v1306 = vpop.f32.mrf.mxu0
          %1307 = vdwg.mxu0
          %1308 = vst [vmem:[%s503] sm:$0xff] %v1303
        $region96: #{tpu_custom_call.1} parent=59 // pred_fallthru
          _
        %s1309 = sand.u32 %s274, 1
        %s1310 = scalar_lea.sflag [#allocation5], %s1309
        %s1311 = sand.u32 %s274, 1
        %s1312 = smul.addr %s1311, 8
        %s1313 = scalar_lea.vmem [#allocation15], %s1312
        // Predicated region
        $region97: #{tpu_custom_call.1} parent=59 // pred_check
          %p1314 = pneg %p284
        $region98: #{tpu_custom_call.1} parent=59 // pred_check_branch
          %1316 = sbr.rel (%p1314) target = $region100
        $region99: #{tpu_custom_call.1} parent=59 // pred_region
          %s1318 = ssub.s32 128, 128
          %1319 = vsyncadd %s1310, %s1318
          %s1320 = smul.addr %s36, 128
          %s1321 = scalar_lea.hbm %s10, %s1320
          %s1323 = sshll.u32 %s1313, 4
          %s1324 = int_to_ptr.vmem [resolvable:$true] %s1323
          %1326 = dma.vmem_to_hbm [thread:$0]  %s1324, 128, %s1321, %s1310
        $region100: #{tpu_custom_call.1} parent=59 // pred_fallthru
          _
      $region60: #{tpu_custom_call.1} parent=5 // pred_fallthru
        _
      %p1327 = scmp.le.s32.totalorder 2, %s27
      // Predicated region
      $region101: #{tpu_custom_call.1} parent=5 // pred_check
        %p1328 = pneg %p1327
      $region102: #{tpu_custom_call.1} parent=5 // pred_check_branch
        %1330 = sbr.rel (%p1328) target = $region104
      $region103: #{tpu_custom_call.1} parent=5 // pred_region
        %s1331 = ssub.s32 %s27, 2
        // Predicated region
        $region105: #{tpu_custom_call.1} parent=103 // pred_check
          %p1332 = pneg %p290
        $region106: #{tpu_custom_call.1} parent=103 // pred_check_branch
          %1334 = sbr.rel (%p1332) target = $region108
        $region107: #{tpu_custom_call.1} parent=103 // pred_region
          %s1335 = sand.u32 %s275, 1
          %s1336 = scalar_lea.sflag [#allocation5], %s1335
          %s1337 = sand.u32 %s275, 1
          %s1338 = smul.addr %s1337, 8
          %s1339 = scalar_lea.vmem [#allocation15], %s1338
          %1340 = dma.done %s1336, 128
        $region108: #{tpu_custom_call.1} parent=103 // pred_fallthru
          _
      $region104: #{tpu_custom_call.1} parent=5 // pred_fallthru
        _
    $region6: #{tpu_custom_call.1} parent=1 // loop_footer
      %s31 = sadd.s32 1, %s27
    $region7: #{tpu_custom_call.1} parent=1 // loop_footer_branch
      %26 = sbr.rel target = $region3
    $region8: #{tpu_custom_call.1} parent=1 // loop_exit
      _
    %1341 = vsyncpa [#allocation4], 1
    %s1342 = scalar_lea.sflag [#allocation4], 1
    %1343 = vsyncpa %s1342, 1
    %1344 = vsyncpa [#allocation7], 1
    %s1345 = scalar_lea.sflag [#allocation7], 1
    %1346 = vsyncpa %s1345, 1
    %1347 = vsyncpa [#allocation10], 1
    %1348 = vsyncpa [#allocation13], 1
    %1349 = vsyncpa [#allocation5], 1
    %s1350 = scalar_lea.sflag [#allocation5], 1
    %1351 = vsyncpa %s1350, 1

</llo_original>
